<compile_context>
chip_gen: v6e
topology: v6e:2x2x1
jax: 0.10.0
libtpu: 0.0.40
codegen_flags: <defaults>
</compile_context>

<pallas_src>
import functools

import jax
import jax.numpy as jnp
import numpy as np
from jax.experimental import pallas as pl
from jax.experimental.pallas import tpu as pltpu


def _make_masks(H, W):
    """(16, H*W) f32 table: rows 0-6 horizontal (dx) validity, 8-14 vertical (dy)."""
    HW = H * W
    lane = np.arange(HW)
    y = lane // W
    c = lane % W
    masks = np.zeros((16, HW), np.float32)
    for d in range(7):
        masks[d] = ((c + d - 3 >= 0) & (c + d - 3 < W)).astype(np.float32)
        masks[8 + d] = ((y + d - 3 >= 0) & (y + d - 3 < H)).astype(np.float32)
    return masks


def _cbam_kernel(x_ref,      # VMEM: (B, C, HW)  lane-dense input
                 wmlp_ref,   # VMEM: (C, 2*Cr)   [lin1.weight.T | lin2.weight]
                 masks_ref,  # VMEM: (16, HW)    rows 0-7 hmask, rows 8-15 vmask
                 wd_ref,     # VMEM: (2, 8, 8)   conv weights [map, dy, dx], zero-padded
                 o_ref,      # VMEM: (B, C, HW)
                 *, B, C, Cr, H, W):
    HW = H * W
    x = x_ref[...].astype(jnp.float32)                      # (B, C, HW)
    wmlp = wmlp_ref[...].astype(jnp.float32)                # (C, 2*Cr)
    w1 = wmlp[:, :Cr]                                       # (C, Cr) == lin1.weight.T
    w2 = wmlp[:, Cr:2 * Cr]                                 # (C, Cr) == lin2.weight
    masks = masks_ref[...]                                  # (16, HW)
    wd = wd_ref[...]                                        # (2, 8, 8)

    # ---------------- Channel attention (tiny MLP; VPU/XLU only) --------------
    avg_c = jnp.mean(x, axis=2, keepdims=True)              # (B, C, 1)  lane reduce
    max_c = jnp.max(x, axis=2, keepdims=True)               # (B, C, 1)
    # lin2 is linear (no bias), so lin2(relu(lin1(a))) + lin2(relu(lin1(m)))
    #   == lin2(relu(lin1(a)) + relu(lin1(m)))  -> share the second layer.
    a1 = jnp.sum(avg_c * w1[None, :, :], axis=1, keepdims=True)   # (B, 1, Cr)
    m1 = jnp.sum(max_c * w1[None, :, :], axis=1, keepdims=True)   # (B, 1, Cr)
    h = jnp.maximum(a1, 0.0) + jnp.maximum(m1, 0.0)               # (B, 1, Cr)
    ca = jax.nn.sigmoid(jnp.sum(w2[None, :, :] * h, axis=2, keepdims=True))  # (B, C, 1)
    x1 = x * ca                                                   # (B, C, HW) dense

    # ---------------- Spatial attention ---------------------------------------
    avg_s = jnp.mean(x1, axis=1, keepdims=True)             # (B, 1, HW) sublane reduce
    max_s = jnp.max(x1, axis=1, keepdims=True)              # (B, 1, HW)

    for b in range(B):                       # B is tiny & static -> unrolled
        maps_b = (avg_s[b], max_s[b])        # each (1, HW), flat lane-dense
        # P[dy, L] = sum_{m,dx} w[m,dy,dx] * map_m[y, c+dx-3]   (y = L//W, c = L%W)
        # Built with 14 rank-1 broadcast FMAs on dense 256-lane rows.
        p = jnp.zeros((8, HW), jnp.float32)
        for dx in range(7):
            hm = masks[dx:dx + 1, :]                             # (1, HW) hmask row
            s = (3 - dx) % HW
            for m in range(2):
                row = maps_b[m]
                if s != 0:
                    row = pltpu.roll(row, shift=s, axis=1)       # XLU lane rotate
                p = p + wd[m, :, dx:dx + 1] * (row * hm)         # (8,1)x(1,HW) FMA

        # conv[L] = sum_dy vmask[dy, L] * P[dy, L + W*(dy-3)]
        conv = jnp.zeros((1, HW), jnp.float32)
        for dy in range(7):
            s = (W * (3 - dy)) % HW
            prow = p[dy:dy + 1, :]
            if s != 0:
                prow = pltpu.roll(prow, shift=s, axis=1)
            conv = conv + prow * masks[8 + dy:9 + dy, :]         # vmask row

        sa = jax.nn.sigmoid(conv)                                # (1, HW)
        o_ref[b] = (x1[b] * sa).astype(o_ref.dtype)              # dense lane store


def cbam_pallas(x, w1, w2, wconv):
    """x: (B, C, H, W) f32; w1/w2: (C, C//ratio); wconv: (1, 2, 7, 7)."""
    B, C, H, W = x.shape
    HW = H * W
    Cr = w1.shape[1]
    assert HW % 128 == 0, "lane-dense flat layout needs H*W % 128 == 0"
    assert C % 8 == 0, "sublane-dense layout needs C % 8 == 0"
    assert wconv.shape == (1, 2, 7, 7)

    x_flat = x.reshape(B, C, HW)
    wmlp = jnp.concatenate([w1, w2], axis=1).astype(jnp.float32)        # (C, 2*Cr)
    masks = jnp.asarray(_make_masks(H, W))                              # (16, HW)
    wd = jnp.zeros((2, 8, 8), jnp.float32).at[:, :7, :7].set(
        wconv[0].astype(jnp.float32))                                   # (2, 8, 8)

    kernel = functools.partial(_cbam_kernel, B=B, C=C, Cr=Cr, H=H, W=W)
    vmem_spec = pl.BlockSpec(memory_space=pltpu.MemorySpace.VMEM)
    # Single invocation, whole batch resident in VMEM (total ~150 KB here, far
    # below the 32 MiB default scoped limit on every generation incl. v7x).
    out_flat = pl.pallas_call(
        kernel,
        out_shape=jax.ShapeDtypeStruct((B, C, HW), x.dtype),
        in_specs=[vmem_spec, vmem_spec, vmem_spec, vmem_spec],
        out_specs=vmem_spec,
    )(x_flat, wmlp, masks, wd)
    return out_flat.reshape(B, C, H, W)


def cbam_ref(x, w1, w2, wconv):
    """Pure-JAX reference mirroring the PyTorch CBAM module (NCHW)."""
    avg_c = x.mean(axis=(2, 3))
    max_c = x.max(axis=(2, 3))

    def mlp(v):
        h = jnp.maximum(v @ w1, 0.0)
        return h @ w2.T

    ca = jax.nn.sigmoid(mlp(avg_c) + mlp(max_c))[:, :, None, None]
    x1 = x * ca
    avg_s = x1.mean(axis=1, keepdims=True)
    max_s = x1.max(axis=1, keepdims=True)
    s = jnp.concatenate([avg_s, max_s], axis=1)                  # (B, 2, H, W)
    conv = jax.lax.conv_general_dilated(
        s, wconv, window_strides=(1, 1), padding=[(3, 3), (3, 3)],
        dimension_numbers=("NCHW", "OIHW", "NCHW"))
    sa = jax.nn.sigmoid(conv)
    return x1 * sa


if __name__ == "__main__":
    B, C, H, W = 2, 32, 16, 16
    ratio, ksize = 16, 7
    Cr = C // ratio

    key = jax.random.PRNGKey(0)
    kx, k1, k2, k3 = jax.random.split(key, 4)

    x = jax.random.normal(kx, (B, C, H, W), dtype=jnp.float32)

    # Synthetic parameters with the module's shapes:
    #   Linear(C, C//ratio, bias=False) -> weight (Cr, C); stored transposed as (C, Cr)
    #   Linear(C//ratio, C, bias=False) -> weight (C, Cr)
    #   Conv2d(2, 1, 7, padding=3, bias=False) -> weight (1, 2, 7, 7)
    w1 = jax.random.normal(k1, (C, Cr), dtype=jnp.float32) * 0.2
    w2 = jax.random.normal(k2, (C, Cr), dtype=jnp.float32) * 0.2
    wconv = jax.random.normal(k3, (1, 2, ksize, ksize), dtype=jnp.float32) * 0.1

    out = cbam_pallas(x, w1, w2, wconv)
    out = jax.block_until_ready(out)

    ref = cbam_ref(x, w1, w2, wconv)
    np.testing.assert_allclose(np.asarray(out), np.asarray(ref), rtol=1e-4, atol=1e-4)

    print("KERNEL_OK")
</pallas_src>

<mosaic_0001>
module attributes {stable_mosaic.version = 11 : i64} {
  func.func @_cbam_kernel(%arg0: memref<2x32x256xf32, #tpu.memory_space<vmem>>, %arg1: memref<32x4xf32, #tpu.memory_space<vmem>>, %arg2: memref<16x256xf32, #tpu.memory_space<vmem>>, %arg3: memref<2x8x8xf32, #tpu.memory_space<vmem>>, %arg4: memref<2x32x256xf32, #tpu.memory_space<vmem>>) attributes {dimension_semantics = [], scalar_prefetch = 0 : i64, scratch_operands = 0 : i64, tpu.core_type = #tpu.core_type<tc>} {
    %c0 = arith.constant 0 : index
    %c0_0 = arith.constant 0 : index
    %c0_1 = arith.constant 0 : index
    %0 = vector.load %arg0[%c0, %c0_0, %c0_1] : memref<2x32x256xf32, #tpu.memory_space<vmem>>, vector<2x32x256xf32>
    %c0_2 = arith.constant 0 : index
    %c0_3 = arith.constant 0 : index
    %1 = vector.load %arg1[%c0_2, %c0_3] : memref<32x4xf32, #tpu.memory_space<vmem>>, vector<32x4xf32>
    %2 = vector.extract_strided_slice %1 {offsets = [0, 0], sizes = [32, 2], strides = [1, 1]} : vector<32x4xf32> to vector<32x2xf32>
    %3 = vector.extract_strided_slice %1 {offsets = [0, 2], sizes = [32, 2], strides = [1, 1]} : vector<32x4xf32> to vector<32x2xf32>
    %c0_4 = arith.constant 0 : index
    %c0_5 = arith.constant 0 : index
    %4 = vector.load %arg2[%c0_4, %c0_5] : memref<16x256xf32, #tpu.memory_space<vmem>>, vector<16x256xf32>
    %c0_6 = arith.constant 0 : index
    %c0_7 = arith.constant 0 : index
    %c0_8 = arith.constant 0 : index
    %5 = vector.load %arg3[%c0_6, %c0_7, %c0_8] : memref<2x8x8xf32, #tpu.memory_space<vmem>>, vector<2x8x8xf32>
    %cst = arith.constant dense<0.000000e+00> : vector<2x32xf32>
    %6 = vector.multi_reduction <add>, %0, %cst [2] : vector<2x32x256xf32> to vector<2x32xf32>
    %7 = vector.shape_cast %6 : vector<2x32xf32> to vector<2x32x1xf32>
    %cst_9 = arith.constant 2.560000e+02 : f32
    %8 = vector.broadcast %cst_9 : f32 to vector<2x32x1xf32>
    %9 = arith.divf %7, %8 : vector<2x32x1xf32>
    %cst_10 = arith.constant dense<0xFF800000> : vector<2x32xf32>
    %10 = vector.multi_reduction <maximumf>, %0, %cst_10 [2] : vector<2x32x256xf32> to vector<2x32xf32>
    %11 = vector.shape_cast %10 : vector<2x32xf32> to vector<2x32x1xf32>
    %12 = vector.shape_cast %2 : vector<32x2xf32> to vector<1x32x2xf32>
    %13 = vector.broadcast %9 : vector<2x32x1xf32> to vector<2x32x2xf32>
    %14 = vector.broadcast %12 : vector<1x32x2xf32> to vector<2x32x2xf32>
    %15 = arith.mulf %13, %14 : vector<2x32x2xf32>
    %cst_11 = arith.constant dense<0.000000e+00> : vector<2x2xf32>
    %16 = vector.multi_reduction <add>, %15, %cst_11 [1] : vector<2x32x2xf32> to vector<2x2xf32>
    %17 = vector.shape_cast %16 : vector<2x2xf32> to vector<2x1x2xf32>
    %18 = vector.shape_cast %2 : vector<32x2xf32> to vector<1x32x2xf32>
    %19 = vector.broadcast %11 : vector<2x32x1xf32> to vector<2x32x2xf32>
    %20 = vector.broadcast %18 : vector<1x32x2xf32> to vector<2x32x2xf32>
    %21 = arith.mulf %19, %20 : vector<2x32x2xf32>
    %cst_12 = arith.constant dense<0.000000e+00> : vector<2x2xf32>
    %22 = vector.multi_reduction <add>, %21, %cst_12 [1] : vector<2x32x2xf32> to vector<2x2xf32>
    %23 = vector.shape_cast %22 : vector<2x2xf32> to vector<2x1x2xf32>
    %cst_13 = arith.constant 0.000000e+00 : f32
    %24 = vector.broadcast %cst_13 : f32 to vector<2x1x2xf32>
    %25 = arith.maximumf %17, %24 : vector<2x1x2xf32>
    %cst_14 = arith.constant 0.000000e+00 : f32
    %26 = vector.broadcast %cst_14 : f32 to vector<2x1x2xf32>
    %27 = arith.maximumf %23, %26 : vector<2x1x2xf32>
    %28 = arith.addf %25, %27 : vector<2x1x2xf32>
    %29 = vector.shape_cast %3 : vector<32x2xf32> to vector<1x32x2xf32>
    %30 = vector.broadcast %29 : vector<1x32x2xf32> to vector<2x32x2xf32>
    %31 = vector.broadcast %28 : vector<2x1x2xf32> to vector<2x32x2xf32>
    %32 = arith.mulf %30, %31 : vector<2x32x2xf32>
    %cst_15 = arith.constant dense<0.000000e+00> : vector<2x32xf32>
    %33 = vector.multi_reduction <add>, %32, %cst_15 [2] : vector<2x32x2xf32> to vector<2x32xf32>
    %34 = vector.shape_cast %33 : vector<2x32xf32> to vector<2x32x1xf32>
    %35 = arith.negf %34 : vector<2x32x1xf32>
    %36 = math.exp %35 : vector<2x32x1xf32>
    %cst_16 = arith.constant 1.000000e+00 : f32
    %37 = vector.broadcast %cst_16 : f32 to vector<2x32x1xf32>
    %38 = arith.addf %37, %36 : vector<2x32x1xf32>
    %39 = arith.divf %37, %38 : vector<2x32x1xf32>
    %40 = vector.broadcast %39 : vector<2x32x1xf32> to vector<2x32x256xf32>
    %41 = arith.mulf %0, %40 : vector<2x32x256xf32>
    %cst_17 = arith.constant dense<0.000000e+00> : vector<2x256xf32>
    %42 = vector.multi_reduction <add>, %41, %cst_17 [1] : vector<2x32x256xf32> to vector<2x256xf32>
    %43 = vector.shape_cast %42 : vector<2x256xf32> to vector<2x1x256xf32>
    %cst_18 = arith.constant 3.200000e+01 : f32
    %44 = vector.broadcast %cst_18 : f32 to vector<2x1x256xf32>
    %45 = arith.divf %43, %44 : vector<2x1x256xf32>
    %cst_19 = arith.constant dense<0xFF800000> : vector<2x256xf32>
    %46 = vector.multi_reduction <maximumf>, %41, %cst_19 [1] : vector<2x32x256xf32> to vector<2x256xf32>
    %47 = vector.shape_cast %46 : vector<2x256xf32> to vector<2x1x256xf32>
    %48 = vector.extract_strided_slice %45 {offsets = [0, 0, 0], sizes = [1, 1, 256], strides = [1, 1, 1]} : vector<2x1x256xf32> to vector<1x1x256xf32>
    %49 = vector.shape_cast %48 : vector<1x1x256xf32> to vector<1x256xf32>
    %50 = vector.extract_strided_slice %47 {offsets = [0, 0, 0], sizes = [1, 1, 256], strides = [1, 1, 1]} : vector<2x1x256xf32> to vector<1x1x256xf32>
    %51 = vector.shape_cast %50 : vector<1x1x256xf32> to vector<1x256xf32>
    %cst_20 = arith.constant 0.000000e+00 : f32
    %52 = vector.broadcast %cst_20 : f32 to vector<8x256xf32>
    %53 = vector.extract_strided_slice %4 {offsets = [0, 0], sizes = [1, 256], strides = [1, 1]} : vector<16x256xf32> to vector<1x256xf32>
    %c3_i32 = arith.constant 3 : i32
    %54 = tpu.dynamic_rotate %49 by %c3_i32 dim 1 : vector<1x256xf32>, i32 -> vector<1x256xf32>
    %55 = vector.extract_strided_slice %5 {offsets = [0, 0, 0], sizes = [1, 8, 1], strides = [1, 1, 1]} : vector<2x8x8xf32> to vector<1x8x1xf32>
    %56 = vector.shape_cast %55 : vector<1x8x1xf32> to vector<8x1xf32>
    %57 = arith.mulf %54, %53 : vector<1x256xf32>
    %58 = vector.broadcast %56 : vector<8x1xf32> to vector<8x256xf32>
    %59 = vector.broadcast %57 : vector<1x256xf32> to vector<8x256xf32>
    %60 = arith.mulf %58, %59 : vector<8x256xf32>
    %61 = arith.addf %52, %60 : vector<8x256xf32>
    %c3_i32_21 = arith.constant 3 : i32
    %62 = tpu.dynamic_rotate %51 by %c3_i32_21 dim 1 : vector<1x256xf32>, i32 -> vector<1x256xf32>
    %63 = vector.extract_strided_slice %5 {offsets = [1, 0, 0], sizes = [1, 8, 1], strides = [1, 1, 1]} : vector<2x8x8xf32> to vector<1x8x1xf32>
    %64 = vector.shape_cast %63 : vector<1x8x1xf32> to vector<8x1xf32>
    %65 = arith.mulf %62, %53 : vector<1x256xf32>
    %66 = vector.broadcast %64 : vector<8x1xf32> to vector<8x256xf32>
    %67 = vector.broadcast %65 : vector<1x256xf32> to vector<8x256xf32>
    %68 = arith.mulf %66, %67 : vector<8x256xf32>
    %69 = arith.addf %61, %68 : vector<8x256xf32>
    %70 = vector.extract_strided_slice %4 {offsets = [1, 0], sizes = [1, 256], strides = [1, 1]} : vector<16x256xf32> to vector<1x256xf32>
    %c2_i32 = arith.constant 2 : i32
    %71 = tpu.dynamic_rotate %49 by %c2_i32 dim 1 : vector<1x256xf32>, i32 -> vector<1x256xf32>
    %72 = vector.extract_strided_slice %5 {offsets = [0, 0, 1], sizes = [1, 8, 1], strides = [1, 1, 1]} : vector<2x8x8xf32> to vector<1x8x1xf32>
    %73 = vector.shape_cast %72 : vector<1x8x1xf32> to vector<8x1xf32>
    %74 = arith.mulf %71, %70 : vector<1x256xf32>
    %75 = vector.broadcast %73 : vector<8x1xf32> to vector<8x256xf32>
    %76 = vector.broadcast %74 : vector<1x256xf32> to vector<8x256xf32>
    %77 = arith.mulf %75, %76 : vector<8x256xf32>
    %78 = arith.addf %69, %77 : vector<8x256xf32>
    %c2_i32_22 = arith.constant 2 : i32
    %79 = tpu.dynamic_rotate %51 by %c2_i32_22 dim 1 : vector<1x256xf32>, i32 -> vector<1x256xf32>
    %80 = vector.extract_strided_slice %5 {offsets = [1, 0, 1], sizes = [1, 8, 1], strides = [1, 1, 1]} : vector<2x8x8xf32> to vector<1x8x1xf32>
    %81 = vector.shape_cast %80 : vector<1x8x1xf32> to vector<8x1xf32>
    %82 = arith.mulf %79, %70 : vector<1x256xf32>
    %83 = vector.broadcast %81 : vector<8x1xf32> to vector<8x256xf32>
    %84 = vector.broadcast %82 : vector<1x256xf32> to vector<8x256xf32>
    %85 = arith.mulf %83, %84 : vector<8x256xf32>
    %86 = arith.addf %78, %85 : vector<8x256xf32>
    %87 = vector.extract_strided_slice %4 {offsets = [2, 0], sizes = [1, 256], strides = [1, 1]} : vector<16x256xf32> to vector<1x256xf32>
    %c1_i32 = arith.constant 1 : i32
    %88 = tpu.dynamic_rotate %49 by %c1_i32 dim 1 : vector<1x256xf32>, i32 -> vector<1x256xf32>
    %89 = vector.extract_strided_slice %5 {offsets = [0, 0, 2], sizes = [1, 8, 1], strides = [1, 1, 1]} : vector<2x8x8xf32> to vector<1x8x1xf32>
    %90 = vector.shape_cast %89 : vector<1x8x1xf32> to vector<8x1xf32>
    %91 = arith.mulf %88, %87 : vector<1x256xf32>
    %92 = vector.broadcast %90 : vector<8x1xf32> to vector<8x256xf32>
    %93 = vector.broadcast %91 : vector<1x256xf32> to vector<8x256xf32>
    %94 = arith.mulf %92, %93 : vector<8x256xf32>
    %95 = arith.addf %86, %94 : vector<8x256xf32>
    %c1_i32_23 = arith.constant 1 : i32
    %96 = tpu.dynamic_rotate %51 by %c1_i32_23 dim 1 : vector<1x256xf32>, i32 -> vector<1x256xf32>
    %97 = vector.extract_strided_slice %5 {offsets = [1, 0, 2], sizes = [1, 8, 1], strides = [1, 1, 1]} : vector<2x8x8xf32> to vector<1x8x1xf32>
    %98 = vector.shape_cast %97 : vector<1x8x1xf32> to vector<8x1xf32>
    %99 = arith.mulf %96, %87 : vector<1x256xf32>
    %100 = vector.broadcast %98 : vector<8x1xf32> to vector<8x256xf32>
    %101 = vector.broadcast %99 : vector<1x256xf32> to vector<8x256xf32>
    %102 = arith.mulf %100, %101 : vector<8x256xf32>
    %103 = arith.addf %95, %102 : vector<8x256xf32>
    %104 = vector.extract_strided_slice %4 {offsets = [3, 0], sizes = [1, 256], strides = [1, 1]} : vector<16x256xf32> to vector<1x256xf32>
    %105 = vector.extract_strided_slice %5 {offsets = [0, 0, 3], sizes = [1, 8, 1], strides = [1, 1, 1]} : vector<2x8x8xf32> to vector<1x8x1xf32>
    %106 = vector.shape_cast %105 : vector<1x8x1xf32> to vector<8x1xf32>
    %107 = arith.mulf %49, %104 : vector<1x256xf32>
    %108 = vector.broadcast %106 : vector<8x1xf32> to vector<8x256xf32>
    %109 = vector.broadcast %107 : vector<1x256xf32> to vector<8x256xf32>
    %110 = arith.mulf %108, %109 : vector<8x256xf32>
    %111 = arith.addf %103, %110 : vector<8x256xf32>
    %112 = vector.extract_strided_slice %5 {offsets = [1, 0, 3], sizes = [1, 8, 1], strides = [1, 1, 1]} : vector<2x8x8xf32> to vector<1x8x1xf32>
    %113 = vector.shape_cast %112 : vector<1x8x1xf32> to vector<8x1xf32>
    %114 = arith.mulf %51, %104 : vector<1x256xf32>
    %115 = vector.broadcast %113 : vector<8x1xf32> to vector<8x256xf32>
    %116 = vector.broadcast %114 : vector<1x256xf32> to vector<8x256xf32>
    %117 = arith.mulf %115, %116 : vector<8x256xf32>
    %118 = arith.addf %111, %117 : vector<8x256xf32>
    %119 = vector.extract_strided_slice %4 {offsets = [4, 0], sizes = [1, 256], strides = [1, 1]} : vector<16x256xf32> to vector<1x256xf32>
    %c255_i32 = arith.constant 255 : i32
    %120 = tpu.dynamic_rotate %49 by %c255_i32 dim 1 : vector<1x256xf32>, i32 -> vector<1x256xf32>
    %121 = vector.extract_strided_slice %5 {offsets = [0, 0, 4], sizes = [1, 8, 1], strides = [1, 1, 1]} : vector<2x8x8xf32> to vector<1x8x1xf32>
    %122 = vector.shape_cast %121 : vector<1x8x1xf32> to vector<8x1xf32>
    %123 = arith.mulf %120, %119 : vector<1x256xf32>
    %124 = vector.broadcast %122 : vector<8x1xf32> to vector<8x256xf32>
    %125 = vector.broadcast %123 : vector<1x256xf32> to vector<8x256xf32>
    %126 = arith.mulf %124, %125 : vector<8x256xf32>
    %127 = arith.addf %118, %126 : vector<8x256xf32>
    %c255_i32_24 = arith.constant 255 : i32
    %128 = tpu.dynamic_rotate %51 by %c255_i32_24 dim 1 : vector<1x256xf32>, i32 -> vector<1x256xf32>
    %129 = vector.extract_strided_slice %5 {offsets = [1, 0, 4], sizes = [1, 8, 1], strides = [1, 1, 1]} : vector<2x8x8xf32> to vector<1x8x1xf32>
    %130 = vector.shape_cast %129 : vector<1x8x1xf32> to vector<8x1xf32>
    %131 = arith.mulf %128, %119 : vector<1x256xf32>
    %132 = vector.broadcast %130 : vector<8x1xf32> to vector<8x256xf32>
    %133 = vector.broadcast %131 : vector<1x256xf32> to vector<8x256xf32>
    %134 = arith.mulf %132, %133 : vector<8x256xf32>
    %135 = arith.addf %127, %134 : vector<8x256xf32>
    %136 = vector.extract_strided_slice %4 {offsets = [5, 0], sizes = [1, 256], strides = [1, 1]} : vector<16x256xf32> to vector<1x256xf32>
    %c254_i32 = arith.constant 254 : i32
    %137 = tpu.dynamic_rotate %49 by %c254_i32 dim 1 : vector<1x256xf32>, i32 -> vector<1x256xf32>
    %138 = vector.extract_strided_slice %5 {offsets = [0, 0, 5], sizes = [1, 8, 1], strides = [1, 1, 1]} : vector<2x8x8xf32> to vector<1x8x1xf32>
    %139 = vector.shape_cast %138 : vector<1x8x1xf32> to vector<8x1xf32>
    %140 = arith.mulf %137, %136 : vector<1x256xf32>
    %141 = vector.broadcast %139 : vector<8x1xf32> to vector<8x256xf32>
    %142 = vector.broadcast %140 : vector<1x256xf32> to vector<8x256xf32>
    %143 = arith.mulf %141, %142 : vector<8x256xf32>
    %144 = arith.addf %135, %143 : vector<8x256xf32>
    %c254_i32_25 = arith.constant 254 : i32
    %145 = tpu.dynamic_rotate %51 by %c254_i32_25 dim 1 : vector<1x256xf32>, i32 -> vector<1x256xf32>
    %146 = vector.extract_strided_slice %5 {offsets = [1, 0, 5], sizes = [1, 8, 1], strides = [1, 1, 1]} : vector<2x8x8xf32> to vector<1x8x1xf32>
    %147 = vector.shape_cast %146 : vector<1x8x1xf32> to vector<8x1xf32>
    %148 = arith.mulf %145, %136 : vector<1x256xf32>
    %149 = vector.broadcast %147 : vector<8x1xf32> to vector<8x256xf32>
    %150 = vector.broadcast %148 : vector<1x256xf32> to vector<8x256xf32>
    %151 = arith.mulf %149, %150 : vector<8x256xf32>
    %152 = arith.addf %144, %151 : vector<8x256xf32>
    %153 = vector.extract_strided_slice %4 {offsets = [6, 0], sizes = [1, 256], strides = [1, 1]} : vector<16x256xf32> to vector<1x256xf32>
    %c253_i32 = arith.constant 253 : i32
    %154 = tpu.dynamic_rotate %49 by %c253_i32 dim 1 : vector<1x256xf32>, i32 -> vector<1x256xf32>
    %155 = vector.extract_strided_slice %5 {offsets = [0, 0, 6], sizes = [1, 8, 1], strides = [1, 1, 1]} : vector<2x8x8xf32> to vector<1x8x1xf32>
    %156 = vector.shape_cast %155 : vector<1x8x1xf32> to vector<8x1xf32>
    %157 = arith.mulf %154, %153 : vector<1x256xf32>
    %158 = vector.broadcast %156 : vector<8x1xf32> to vector<8x256xf32>
    %159 = vector.broadcast %157 : vector<1x256xf32> to vector<8x256xf32>
    %160 = arith.mulf %158, %159 : vector<8x256xf32>
    %161 = arith.addf %152, %160 : vector<8x256xf32>
    %c253_i32_26 = arith.constant 253 : i32
    %162 = tpu.dynamic_rotate %51 by %c253_i32_26 dim 1 : vector<1x256xf32>, i32 -> vector<1x256xf32>
    %163 = vector.extract_strided_slice %5 {offsets = [1, 0, 6], sizes = [1, 8, 1], strides = [1, 1, 1]} : vector<2x8x8xf32> to vector<1x8x1xf32>
    %164 = vector.shape_cast %163 : vector<1x8x1xf32> to vector<8x1xf32>
    %165 = arith.mulf %162, %153 : vector<1x256xf32>
    %166 = vector.broadcast %164 : vector<8x1xf32> to vector<8x256xf32>
    %167 = vector.broadcast %165 : vector<1x256xf32> to vector<8x256xf32>
    %168 = arith.mulf %166, %167 : vector<8x256xf32>
    %169 = arith.addf %161, %168 : vector<8x256xf32>
    %cst_27 = arith.constant 0.000000e+00 : f32
    %170 = vector.broadcast %cst_27 : f32 to vector<1x256xf32>
    %171 = vector.extract_strided_slice %169 {offsets = [0, 0], sizes = [1, 256], strides = [1, 1]} : vector<8x256xf32> to vector<1x256xf32>
    %c48_i32 = arith.constant 48 : i32
    %172 = tpu.dynamic_rotate %171 by %c48_i32 dim 1 : vector<1x256xf32>, i32 -> vector<1x256xf32>
    %173 = vector.extract_strided_slice %4 {offsets = [8, 0], sizes = [1, 256], strides = [1, 1]} : vector<16x256xf32> to vector<1x256xf32>
    %174 = arith.mulf %172, %173 : vector<1x256xf32>
    %175 = arith.addf %170, %174 : vector<1x256xf32>
    %176 = vector.extract_strided_slice %169 {offsets = [1, 0], sizes = [1, 256], strides = [1, 1]} : vector<8x256xf32> to vector<1x256xf32>
    %c32_i32 = arith.constant 32 : i32
    %177 = tpu.dynamic_rotate %176 by %c32_i32 dim 1 : vector<1x256xf32>, i32 -> vector<1x256xf32>
    %178 = vector.extract_strided_slice %4 {offsets = [9, 0], sizes = [1, 256], strides = [1, 1]} : vector<16x256xf32> to vector<1x256xf32>
    %179 = arith.mulf %177, %178 : vector<1x256xf32>
    %180 = arith.addf %175, %179 : vector<1x256xf32>
    %181 = vector.extract_strided_slice %169 {offsets = [2, 0], sizes = [1, 256], strides = [1, 1]} : vector<8x256xf32> to vector<1x256xf32>
    %c16_i32 = arith.constant 16 : i32
    %182 = tpu.dynamic_rotate %181 by %c16_i32 dim 1 : vector<1x256xf32>, i32 -> vector<1x256xf32>
    %183 = vector.extract_strided_slice %4 {offsets = [10, 0], sizes = [1, 256], strides = [1, 1]} : vector<16x256xf32> to vector<1x256xf32>
    %184 = arith.mulf %182, %183 : vector<1x256xf32>
    %185 = arith.addf %180, %184 : vector<1x256xf32>
    %186 = vector.extract_strided_slice %169 {offsets = [3, 0], sizes = [1, 256], strides = [1, 1]} : vector<8x256xf32> to vector<1x256xf32>
    %187 = vector.extract_strided_slice %4 {offsets = [11, 0], sizes = [1, 256], strides = [1, 1]} : vector<16x256xf32> to vector<1x256xf32>
    %188 = arith.mulf %186, %187 : vector<1x256xf32>
    %189 = arith.addf %185, %188 : vector<1x256xf32>
    %190 = vector.extract_strided_slice %169 {offsets = [4, 0], sizes = [1, 256], strides = [1, 1]} : vector<8x256xf32> to vector<1x256xf32>
    %c240_i32 = arith.constant 240 : i32
    %191 = tpu.dynamic_rotate %190 by %c240_i32 dim 1 : vector<1x256xf32>, i32 -> vector<1x256xf32>
    %192 = vector.extract_strided_slice %4 {offsets = [12, 0], sizes = [1, 256], strides = [1, 1]} : vector<16x256xf32> to vector<1x256xf32>
    %193 = arith.mulf %191, %192 : vector<1x256xf32>
    %194 = arith.addf %189, %193 : vector<1x256xf32>
    %195 = vector.extract_strided_slice %169 {offsets = [5, 0], sizes = [1, 256], strides = [1, 1]} : vector<8x256xf32> to vector<1x256xf32>
    %c224_i32 = arith.constant 224 : i32
    %196 = tpu.dynamic_rotate %195 by %c224_i32 dim 1 : vector<1x256xf32>, i32 -> vector<1x256xf32>
    %197 = vector.extract_strided_slice %4 {offsets = [13, 0], sizes = [1, 256], strides = [1, 1]} : vector<16x256xf32> to vector<1x256xf32>
    %198 = arith.mulf %196, %197 : vector<1x256xf32>
    %199 = arith.addf %194, %198 : vector<1x256xf32>
    %200 = vector.extract_strided_slice %169 {offsets = [6, 0], sizes = [1, 256], strides = [1, 1]} : vector<8x256xf32> to vector<1x256xf32>
    %c208_i32 = arith.constant 208 : i32
    %201 = tpu.dynamic_rotate %200 by %c208_i32 dim 1 : vector<1x256xf32>, i32 -> vector<1x256xf32>
    %202 = vector.extract_strided_slice %4 {offsets = [14, 0], sizes = [1, 256], strides = [1, 1]} : vector<16x256xf32> to vector<1x256xf32>
    %203 = arith.mulf %201, %202 : vector<1x256xf32>
    %204 = arith.addf %199, %203 : vector<1x256xf32>
    %205 = arith.negf %204 : vector<1x256xf32>
    %206 = math.exp %205 : vector<1x256xf32>
    %cst_28 = arith.constant 1.000000e+00 : f32
    %207 = vector.broadcast %cst_28 : f32 to vector<1x256xf32>
    %208 = arith.addf %207, %206 : vector<1x256xf32>
    %209 = arith.divf %207, %208 : vector<1x256xf32>
    %210 = vector.extract_strided_slice %41 {offsets = [0, 0, 0], sizes = [1, 32, 256], strides = [1, 1, 1]} : vector<2x32x256xf32> to vector<1x32x256xf32>
    %211 = vector.shape_cast %210 : vector<1x32x256xf32> to vector<32x256xf32>
    %212 = vector.broadcast %209 : vector<1x256xf32> to vector<32x256xf32>
    %213 = arith.mulf %211, %212 : vector<32x256xf32>
    %c0_29 = arith.constant 0 : index
    %c0_30 = arith.constant 0 : index
    %c0_31 = arith.constant 0 : index
    %214 = vector.load %arg4[%c0_29, %c0_30, %c0_31] : memref<2x32x256xf32, #tpu.memory_space<vmem>>, vector<1x32x256xf32>
    %215 = vector.shape_cast %214 : vector<1x32x256xf32> to vector<32x256xf32>
    %216 = vector.shape_cast %213 : vector<32x256xf32> to vector<1x32x256xf32>
    tpu.vector_store %arg4[%c0_29, %c0_30, %c0_31], %216 {strides = array<i32>} : memref<2x32x256xf32, #tpu.memory_space<vmem>>, vector<1x32x256xf32>,
    %217 = vector.extract_strided_slice %45 {offsets = [1, 0, 0], sizes = [1, 1, 256], strides = [1, 1, 1]} : vector<2x1x256xf32> to vector<1x1x256xf32>
    %218 = vector.shape_cast %217 : vector<1x1x256xf32> to vector<1x256xf32>
    %219 = vector.extract_strided_slice %47 {offsets = [1, 0, 0], sizes = [1, 1, 256], strides = [1, 1, 1]} : vector<2x1x256xf32> to vector<1x1x256xf32>
    %220 = vector.shape_cast %219 : vector<1x1x256xf32> to vector<1x256xf32>
    %cst_32 = arith.constant 0.000000e+00 : f32
    %221 = vector.broadcast %cst_32 : f32 to vector<8x256xf32>
    %222 = vector.extract_strided_slice %4 {offsets = [0, 0], sizes = [1, 256], strides = [1, 1]} : vector<16x256xf32> to vector<1x256xf32>
    %c3_i32_33 = arith.constant 3 : i32
    %223 = tpu.dynamic_rotate %218 by %c3_i32_33 dim 1 : vector<1x256xf32>, i32 -> vector<1x256xf32>
    %224 = vector.extract_strided_slice %5 {offsets = [0, 0, 0], sizes = [1, 8, 1], strides = [1, 1, 1]} : vector<2x8x8xf32> to vector<1x8x1xf32>
    %225 = vector.shape_cast %224 : vector<1x8x1xf32> to vector<8x1xf32>
    %226 = arith.mulf %223, %222 : vector<1x256xf32>
    %227 = vector.broadcast %225 : vector<8x1xf32> to vector<8x256xf32>
    %228 = vector.broadcast %226 : vector<1x256xf32> to vector<8x256xf32>
    %229 = arith.mulf %227, %228 : vector<8x256xf32>
    %230 = arith.addf %221, %229 : vector<8x256xf32>
    %c3_i32_34 = arith.constant 3 : i32
    %231 = tpu.dynamic_rotate %220 by %c3_i32_34 dim 1 : vector<1x256xf32>, i32 -> vector<1x256xf32>
    %232 = vector.extract_strided_slice %5 {offsets = [1, 0, 0], sizes = [1, 8, 1], strides = [1, 1, 1]} : vector<2x8x8xf32> to vector<1x8x1xf32>
    %233 = vector.shape_cast %232 : vector<1x8x1xf32> to vector<8x1xf32>
    %234 = arith.mulf %231, %222 : vector<1x256xf32>
    %235 = vector.broadcast %233 : vector<8x1xf32> to vector<8x256xf32>
    %236 = vector.broadcast %234 : vector<1x256xf32> to vector<8x256xf32>
    %237 = arith.mulf %235, %236 : vector<8x256xf32>
    %238 = arith.addf %230, %237 : vector<8x256xf32>
    %239 = vector.extract_strided_slice %4 {offsets = [1, 0], sizes = [1, 256], strides = [1, 1]} : vector<16x256xf32> to vector<1x256xf32>
    %c2_i32_35 = arith.constant 2 : i32
    %240 = tpu.dynamic_rotate %218 by %c2_i32_35 dim 1 : vector<1x256xf32>, i32 -> vector<1x256xf32>
    %241 = vector.extract_strided_slice %5 {offsets = [0, 0, 1], sizes = [1, 8, 1], strides = [1, 1, 1]} : vector<2x8x8xf32> to vector<1x8x1xf32>
    %242 = vector.shape_cast %241 : vector<1x8x1xf32> to vector<8x1xf32>
    %243 = arith.mulf %240, %239 : vector<1x256xf32>
    %244 = vector.broadcast %242 : vector<8x1xf32> to vector<8x256xf32>
    %245 = vector.broadcast %243 : vector<1x256xf32> to vector<8x256xf32>
    %246 = arith.mulf %244, %245 : vector<8x256xf32>
    %247 = arith.addf %238, %246 : vector<8x256xf32>
    %c2_i32_36 = arith.constant 2 : i32
    %248 = tpu.dynamic_rotate %220 by %c2_i32_36 dim 1 : vector<1x256xf32>, i32 -> vector<1x256xf32>
    %249 = vector.extract_strided_slice %5 {offsets = [1, 0, 1], sizes = [1, 8, 1], strides = [1, 1, 1]} : vector<2x8x8xf32> to vector<1x8x1xf32>
    %250 = vector.shape_cast %249 : vector<1x8x1xf32> to vector<8x1xf32>
    %251 = arith.mulf %248, %239 : vector<1x256xf32>
    %252 = vector.broadcast %250 : vector<8x1xf32> to vector<8x256xf32>
    %253 = vector.broadcast %251 : vector<1x256xf32> to vector<8x256xf32>
    %254 = arith.mulf %252, %253 : vector<8x256xf32>
    %255 = arith.addf %247, %254 : vector<8x256xf32>
    %256 = vector.extract_strided_slice %4 {offsets = [2, 0], sizes = [1, 256], strides = [1, 1]} : vector<16x256xf32> to vector<1x256xf32>
    %c1_i32_37 = arith.constant 1 : i32
    %257 = tpu.dynamic_rotate %218 by %c1_i32_37 dim 1 : vector<1x256xf32>, i32 -> vector<1x256xf32>
    %258 = vector.extract_strided_slice %5 {offsets = [0, 0, 2], sizes = [1, 8, 1], strides = [1, 1, 1]} : vector<2x8x8xf32> to vector<1x8x1xf32>
    %259 = vector.shape_cast %258 : vector<1x8x1xf32> to vector<8x1xf32>
    %260 = arith.mulf %257, %256 : vector<1x256xf32>
    %261 = vector.broadcast %259 : vector<8x1xf32> to vector<8x256xf32>
    %262 = vector.broadcast %260 : vector<1x256xf32> to vector<8x256xf32>
    %263 = arith.mulf %261, %262 : vector<8x256xf32>
    %264 = arith.addf %255, %263 : vector<8x256xf32>
    %c1_i32_38 = arith.constant 1 : i32
    %265 = tpu.dynamic_rotate %220 by %c1_i32_38 dim 1 : vector<1x256xf32>, i32 -> vector<1x256xf32>
    %266 = vector.extract_strided_slice %5 {offsets = [1, 0, 2], sizes = [1, 8, 1], strides = [1, 1, 1]} : vector<2x8x8xf32> to vector<1x8x1xf32>
    %267 = vector.shape_cast %266 : vector<1x8x1xf32> to vector<8x1xf32>
    %268 = arith.mulf %265, %256 : vector<1x256xf32>
    %269 = vector.broadcast %267 : vector<8x1xf32> to vector<8x256xf32>
    %270 = vector.broadcast %268 : vector<1x256xf32> to vector<8x256xf32>
    %271 = arith.mulf %269, %270 : vector<8x256xf32>
    %272 = arith.addf %264, %271 : vector<8x256xf32>
    %273 = vector.extract_strided_slice %4 {offsets = [3, 0], sizes = [1, 256], strides = [1, 1]} : vector<16x256xf32> to vector<1x256xf32>
    %274 = vector.extract_strided_slice %5 {offsets = [0, 0, 3], sizes = [1, 8, 1], strides = [1, 1, 1]} : vector<2x8x8xf32> to vector<1x8x1xf32>
    %275 = vector.shape_cast %274 : vector<1x8x1xf32> to vector<8x1xf32>
    %276 = arith.mulf %218, %273 : vector<1x256xf32>
    %277 = vector.broadcast %275 : vector<8x1xf32> to vector<8x256xf32>
    %278 = vector.broadcast %276 : vector<1x256xf32> to vector<8x256xf32>
    %279 = arith.mulf %277, %278 : vector<8x256xf32>
    %280 = arith.addf %272, %279 : vector<8x256xf32>
    %281 = vector.extract_strided_slice %5 {offsets = [1, 0, 3], sizes = [1, 8, 1], strides = [1, 1, 1]} : vector<2x8x8xf32> to vector<1x8x1xf32>
    %282 = vector.shape_cast %281 : vector<1x8x1xf32> to vector<8x1xf32>
    %283 = arith.mulf %220, %273 : vector<1x256xf32>
    %284 = vector.broadcast %282 : vector<8x1xf32> to vector<8x256xf32>
    %285 = vector.broadcast %283 : vector<1x256xf32> to vector<8x256xf32>
    %286 = arith.mulf %284, %285 : vector<8x256xf32>
    %287 = arith.addf %280, %286 : vector<8x256xf32>
    %288 = vector.extract_strided_slice %4 {offsets = [4, 0], sizes = [1, 256], strides = [1, 1]} : vector<16x256xf32> to vector<1x256xf32>
    %c255_i32_39 = arith.constant 255 : i32
    %289 = tpu.dynamic_rotate %218 by %c255_i32_39 dim 1 : vector<1x256xf32>, i32 -> vector<1x256xf32>
    %290 = vector.extract_strided_slice %5 {offsets = [0, 0, 4], sizes = [1, 8, 1], strides = [1, 1, 1]} : vector<2x8x8xf32> to vector<1x8x1xf32>
    %291 = vector.shape_cast %290 : vector<1x8x1xf32> to vector<8x1xf32>
    %292 = arith.mulf %289, %288 : vector<1x256xf32>
    %293 = vector.broadcast %291 : vector<8x1xf32> to vector<8x256xf32>
    %294 = vector.broadcast %292 : vector<1x256xf32> to vector<8x256xf32>
    %295 = arith.mulf %293, %294 : vector<8x256xf32>
    %296 = arith.addf %287, %295 : vector<8x256xf32>
    %c255_i32_40 = arith.constant 255 : i32
    %297 = tpu.dynamic_rotate %220 by %c255_i32_40 dim 1 : vector<1x256xf32>, i32 -> vector<1x256xf32>
    %298 = vector.extract_strided_slice %5 {offsets = [1, 0, 4], sizes = [1, 8, 1], strides = [1, 1, 1]} : vector<2x8x8xf32> to vector<1x8x1xf32>
    %299 = vector.shape_cast %298 : vector<1x8x1xf32> to vector<8x1xf32>
    %300 = arith.mulf %297, %288 : vector<1x256xf32>
    %301 = vector.broadcast %299 : vector<8x1xf32> to vector<8x256xf32>
    %302 = vector.broadcast %300 : vector<1x256xf32> to vector<8x256xf32>
    %303 = arith.mulf %301, %302 : vector<8x256xf32>
    %304 = arith.addf %296, %303 : vector<8x256xf32>
    %305 = vector.extract_strided_slice %4 {offsets = [5, 0], sizes = [1, 256], strides = [1, 1]} : vector<16x256xf32> to vector<1x256xf32>
    %c254_i32_41 = arith.constant 254 : i32
    %306 = tpu.dynamic_rotate %218 by %c254_i32_41 dim 1 : vector<1x256xf32>, i32 -> vector<1x256xf32>
    %307 = vector.extract_strided_slice %5 {offsets = [0, 0, 5], sizes = [1, 8, 1], strides = [1, 1, 1]} : vector<2x8x8xf32> to vector<1x8x1xf32>
    %308 = vector.shape_cast %307 : vector<1x8x1xf32> to vector<8x1xf32>
    %309 = arith.mulf %306, %305 : vector<1x256xf32>
    %310 = vector.broadcast %308 : vector<8x1xf32> to vector<8x256xf32>
    %311 = vector.broadcast %309 : vector<1x256xf32> to vector<8x256xf32>
    %312 = arith.mulf %310, %311 : vector<8x256xf32>
    %313 = arith.addf %304, %312 : vector<8x256xf32>
    %c254_i32_42 = arith.constant 254 : i32
    %314 = tpu.dynamic_rotate %220 by %c254_i32_42 dim 1 : vector<1x256xf32>, i32 -> vector<1x256xf32>
    %315 = vector.extract_strided_slice %5 {offsets = [1, 0, 5], sizes = [1, 8, 1], strides = [1, 1, 1]} : vector<2x8x8xf32> to vector<1x8x1xf32>
    %316 = vector.shape_cast %315 : vector<1x8x1xf32> to vector<8x1xf32>
    %317 = arith.mulf %314, %305 : vector<1x256xf32>
    %318 = vector.broadcast %316 : vector<8x1xf32> to vector<8x256xf32>
    %319 = vector.broadcast %317 : vector<1x256xf32> to vector<8x256xf32>
    %320 = arith.mulf %318, %319 : vector<8x256xf32>
    %321 = arith.addf %313, %320 : vector<8x256xf32>
    %322 = vector.extract_strided_slice %4 {offsets = [6, 0], sizes = [1, 256], strides = [1, 1]} : vector<16x256xf32> to vector<1x256xf32>
    %c253_i32_43 = arith.constant 253 : i32
    %323 = tpu.dynamic_rotate %218 by %c253_i32_43 dim 1 : vector<1x256xf32>, i32 -> vector<1x256xf32>
    %324 = vector.extract_strided_slice %5 {offsets = [0, 0, 6], sizes = [1, 8, 1], strides = [1, 1, 1]} : vector<2x8x8xf32> to vector<1x8x1xf32>
    %325 = vector.shape_cast %324 : vector<1x8x1xf32> to vector<8x1xf32>
    %326 = arith.mulf %323, %322 : vector<1x256xf32>
    %327 = vector.broadcast %325 : vector<8x1xf32> to vector<8x256xf32>
    %328 = vector.broadcast %326 : vector<1x256xf32> to vector<8x256xf32>
    %329 = arith.mulf %327, %328 : vector<8x256xf32>
    %330 = arith.addf %321, %329 : vector<8x256xf32>
    %c253_i32_44 = arith.constant 253 : i32
    %331 = tpu.dynamic_rotate %220 by %c253_i32_44 dim 1 : vector<1x256xf32>, i32 -> vector<1x256xf32>
    %332 = vector.extract_strided_slice %5 {offsets = [1, 0, 6], sizes = [1, 8, 1], strides = [1, 1, 1]} : vector<2x8x8xf32> to vector<1x8x1xf32>
    %333 = vector.shape_cast %332 : vector<1x8x1xf32> to vector<8x1xf32>
    %334 = arith.mulf %331, %322 : vector<1x256xf32>
    %335 = vector.broadcast %333 : vector<8x1xf32> to vector<8x256xf32>
    %336 = vector.broadcast %334 : vector<1x256xf32> to vector<8x256xf32>
    %337 = arith.mulf %335, %336 : vector<8x256xf32>
    %338 = arith.addf %330, %337 : vector<8x256xf32>
    %cst_45 = arith.constant 0.000000e+00 : f32
    %339 = vector.broadcast %cst_45 : f32 to vector<1x256xf32>
    %340 = vector.extract_strided_slice %338 {offsets = [0, 0], sizes = [1, 256], strides = [1, 1]} : vector<8x256xf32> to vector<1x256xf32>
    %c48_i32_46 = arith.constant 48 : i32
    %341 = tpu.dynamic_rotate %340 by %c48_i32_46 dim 1 : vector<1x256xf32>, i32 -> vector<1x256xf32>
    %342 = vector.extract_strided_slice %4 {offsets = [8, 0], sizes = [1, 256], strides = [1, 1]} : vector<16x256xf32> to vector<1x256xf32>
    %343 = arith.mulf %341, %342 : vector<1x256xf32>
    %344 = arith.addf %339, %343 : vector<1x256xf32>
    %345 = vector.extract_strided_slice %338 {offsets = [1, 0], sizes = [1, 256], strides = [1, 1]} : vector<8x256xf32> to vector<1x256xf32>
    %c32_i32_47 = arith.constant 32 : i32
    %346 = tpu.dynamic_rotate %345 by %c32_i32_47 dim 1 : vector<1x256xf32>, i32 -> vector<1x256xf32>
    %347 = vector.extract_strided_slice %4 {offsets = [9, 0], sizes = [1, 256], strides = [1, 1]} : vector<16x256xf32> to vector<1x256xf32>
    %348 = arith.mulf %346, %347 : vector<1x256xf32>
    %349 = arith.addf %344, %348 : vector<1x256xf32>
    %350 = vector.extract_strided_slice %338 {offsets = [2, 0], sizes = [1, 256], strides = [1, 1]} : vector<8x256xf32> to vector<1x256xf32>
    %c16_i32_48 = arith.constant 16 : i32
    %351 = tpu.dynamic_rotate %350 by %c16_i32_48 dim 1 : vector<1x256xf32>, i32 -> vector<1x256xf32>
    %352 = vector.extract_strided_slice %4 {offsets = [10, 0], sizes = [1, 256], strides = [1, 1]} : vector<16x256xf32> to vector<1x256xf32>
    %353 = arith.mulf %351, %352 : vector<1x256xf32>
    %354 = arith.addf %349, %353 : vector<1x256xf32>
    %355 = vector.extract_strided_slice %338 {offsets = [3, 0], sizes = [1, 256], strides = [1, 1]} : vector<8x256xf32> to vector<1x256xf32>
    %356 = vector.extract_strided_slice %4 {offsets = [11, 0], sizes = [1, 256], strides = [1, 1]} : vector<16x256xf32> to vector<1x256xf32>
    %357 = arith.mulf %355, %356 : vector<1x256xf32>
    %358 = arith.addf %354, %357 : vector<1x256xf32>
    %359 = vector.extract_strided_slice %338 {offsets = [4, 0], sizes = [1, 256], strides = [1, 1]} : vector<8x256xf32> to vector<1x256xf32>
    %c240_i32_49 = arith.constant 240 : i32
    %360 = tpu.dynamic_rotate %359 by %c240_i32_49 dim 1 : vector<1x256xf32>, i32 -> vector<1x256xf32>
    %361 = vector.extract_strided_slice %4 {offsets = [12, 0], sizes = [1, 256], strides = [1, 1]} : vector<16x256xf32> to vector<1x256xf32>
    %362 = arith.mulf %360, %361 : vector<1x256xf32>
    %363 = arith.addf %358, %362 : vector<1x256xf32>
    %364 = vector.extract_strided_slice %338 {offsets = [5, 0], sizes = [1, 256], strides = [1, 1]} : vector<8x256xf32> to vector<1x256xf32>
    %c224_i32_50 = arith.constant 224 : i32
    %365 = tpu.dynamic_rotate %364 by %c224_i32_50 dim 1 : vector<1x256xf32>, i32 -> vector<1x256xf32>
    %366 = vector.extract_strided_slice %4 {offsets = [13, 0], sizes = [1, 256], strides = [1, 1]} : vector<16x256xf32> to vector<1x256xf32>
    %367 = arith.mulf %365, %366 : vector<1x256xf32>
    %368 = arith.addf %363, %367 : vector<1x256xf32>
    %369 = vector.extract_strided_slice %338 {offsets = [6, 0], sizes = [1, 256], strides = [1, 1]} : vector<8x256xf32> to vector<1x256xf32>
    %c208_i32_51 = arith.constant 208 : i32
    %370 = tpu.dynamic_rotate %369 by %c208_i32_51 dim 1 : vector<1x256xf32>, i32 -> vector<1x256xf32>
    %371 = vector.extract_strided_slice %4 {offsets = [14, 0], sizes = [1, 256], strides = [1, 1]} : vector<16x256xf32> to vector<1x256xf32>
    %372 = arith.mulf %370, %371 : vector<1x256xf32>
    %373 = arith.addf %368, %372 : vector<1x256xf32>
    %374 = arith.negf %373 : vector<1x256xf32>
    %375 = math.exp %374 : vector<1x256xf32>
    %cst_52 = arith.constant 1.000000e+00 : f32
    %376 = vector.broadcast %cst_52 : f32 to vector<1x256xf32>
    %377 = arith.addf %376, %375 : vector<1x256xf32>
    %378 = arith.divf %376, %377 : vector<1x256xf32>
    %379 = vector.extract_strided_slice %41 {offsets = [1, 0, 0], sizes = [1, 32, 256], strides = [1, 1, 1]} : vector<2x32x256xf32> to vector<1x32x256xf32>
    %380 = vector.shape_cast %379 : vector<1x32x256xf32> to vector<32x256xf32>
    %381 = vector.broadcast %378 : vector<1x256xf32> to vector<32x256xf32>
    %382 = arith.mulf %380, %381 : vector<32x256xf32>
    %c1 = arith.constant 1 : index
    %c0_53 = arith.constant 0 : index
    %c0_54 = arith.constant 0 : index
    %383 = vector.load %arg4[%c1, %c0_53, %c0_54] : memref<2x32x256xf32, #tpu.memory_space<vmem>>, vector<1x32x256xf32>
    %384 = vector.shape_cast %383 : vector<1x32x256xf32> to vector<32x256xf32>
    %385 = vector.shape_cast %382 : vector<32x256xf32> to vector<1x32x256xf32>
    tpu.vector_store %arg4[%c1, %c0_53, %c0_54], %385 {strides = array<i32>} : memref<2x32x256xf32, #tpu.memory_space<vmem>>, vector<1x32x256xf32>,
    return
  }
}

</mosaic_0001>

<llo_original>
// kernel: tpu_custom_call.1
$region0: #{tpu_custom_call.1}
  #allocation0 [shape = 'u32[]', space=smem, size = 0x4, offset = 0x4, fixed_abs, tag = 'smem constant byte address 0x4 - core index']
  #allocation1 [shape = 'u32[144,128]{1,0:T(1,128)}', space=vmem, size = 0x12000, scoped, tag = 'internal scratch']
  %s0 = inlined_call_operand.hbm [shape: f32[2,32,256], index: 0, kind: input, shape index: {}]
  %s1 = inlined_call_operand.vmem [shape: f32[32,4], index: 1, kind: input, shape index: {}]
  %s2 = inlined_call_operand.vmem [shape: f32[16,256], index: 2, kind: input, shape index: {}]
  %s3 = inlined_call_operand.hbm [shape: f32[2,8,8], index: 3, kind: input, shape index: {}]
  %s4 = inlined_call_operand.hbm [shape: f32[2,32,256], index: 4, kind: output, shape index: {}]
  %s5 = sld [smem:[#allocation0]]
  $region34: #{tpu_custom_call.1} parent=0
    _
  %s7 = ssub.s32 1, %s5
  %s8 = scalar_select 0, %s7, %s5
  $region1: #{tpu_custom_call.1} parent=0
    #allocation2 [shape = 'u8[65536]{0}', space=vmem, size = 0x10000, scoped, tag = 'input window, operand 0, single buffered']
    #allocation3 [shape = 's32[1]{0}', space=sflag, size = 0x4, scoped, tag = 'scoped memory for tpu_custom_call.1']
    #allocation4 [shape = 's32[1]{0}', space=sflag, size = 0x4, scoped, tag = 'scoped memory for tpu_custom_call.1']
    #allocation5 [shape = 'u8[8192]{0}', space=vmem, size = 0x2000, scoped, tag = 'input window, operand 3, single buffered']
    #allocation6 [shape = 's32[1]{0}', space=sflag, size = 0x4, scoped, tag = 'scoped memory for tpu_custom_call.1']
    #allocation7 [shape = 'u8[65536]{0}', space=vmem, size = 0x10000, scoped, tag = 'output window, operand 0, single buffered']
    %9 = vsyncpa [#allocation3], 0
    %10 = vsyncpa [#allocation6], 0
    %11 = vsyncpa [#allocation4], 0
    // Predicated region
    $region2: #{tpu_custom_call.1} parent=1 // pred_check
      _
    $region3: #{tpu_custom_call.1} parent=1 // pred_check_branch
      %13 = sbr.rel (0) target = $region5
    $region4: #{tpu_custom_call.1} parent=1 // pred_region
      %s15 = ssub.s32 2048, 2048
      %16 = vsyncadd [#allocation3], %s15
      %s17 = sshll.u32 [#allocation2], 4
      %s18 = int_to_ptr.vmem [resolvable:$true] %s17
      %23 = dma.hbm_to_vmem [thread:$0]  %s0, 2048, %s18, [#allocation3], 256, 256, 16
    $region5: #{tpu_custom_call.1} parent=1 // pred_fallthru
      _
    // Predicated region
    $region6: #{tpu_custom_call.1} parent=1 // pred_check
      _
    $region7: #{tpu_custom_call.1} parent=1 // pred_check_branch
      %25 = sbr.rel (0) target = $region9
    $region8: #{tpu_custom_call.1} parent=1 // pred_region
      _
    $region9: #{tpu_custom_call.1} parent=1 // pred_fallthru
      _
    // Predicated region
    $region10: #{tpu_custom_call.1} parent=1 // pred_check
      _
    $region11: #{tpu_custom_call.1} parent=1 // pred_check_branch
      %27 = sbr.rel (0) target = $region13
    $region12: #{tpu_custom_call.1} parent=1 // pred_region
      _
    $region13: #{tpu_custom_call.1} parent=1 // pred_fallthru
      _
    // Predicated region
    $region14: #{tpu_custom_call.1} parent=1 // pred_check
      _
    $region15: #{tpu_custom_call.1} parent=1 // pred_check_branch
      %29 = sbr.rel (0) target = $region17
    $region16: #{tpu_custom_call.1} parent=1 // pred_region
      %s31 = ssub.s32 256, 256
      %32 = vsyncadd [#allocation6], %s31
      %s33 = sshll.u32 [#allocation5], 4
      %s34 = int_to_ptr.vmem [resolvable:$true] %s33
      %39 = dma.hbm_to_vmem [thread:$0]  %s3, 256, %s34, [#allocation6], 128, 128, 8
    $region17: #{tpu_custom_call.1} parent=1 // pred_fallthru
      _
    // Predicated region
    $region18: #{tpu_custom_call.1} parent=1 // pred_check
      _
    $region19: #{tpu_custom_call.1} parent=1 // pred_check_branch
      %41 = sbr.rel (0) target = $region21
    $region20: #{tpu_custom_call.1} parent=1 // pred_region
      %42 = dma.done [#allocation3], 2048
    $region21: #{tpu_custom_call.1} parent=1 // pred_fallthru
      _
    // Predicated region
    $region22: #{tpu_custom_call.1} parent=1 // pred_check
      _
    $region23: #{tpu_custom_call.1} parent=1 // pred_check_branch
      %44 = sbr.rel (0) target = $region25
    $region24: #{tpu_custom_call.1} parent=1 // pred_region
      %45 = dma.done [#allocation6], 256
    $region25: #{tpu_custom_call.1} parent=1 // pred_fallthru
      _
    %v46 = vld [vmem:[#allocation2] sm:$0xff]
    %v47 = vld [vmem:[#allocation2 + $0x8] sm:$0xff]
    %v48 = vld [vmem:[#allocation2 + $0x10] sm:$0xff]
    %v49 = vld [vmem:[#allocation2 + $0x18] sm:$0xff]
    %v50 = vld [vmem:[#allocation2 + $0x20] sm:$0xff]
    %v51 = vld [vmem:[#allocation2 + $0x28] sm:$0xff]
    %v52 = vld [vmem:[#allocation2 + $0x30] sm:$0xff]
    %v53 = vld [vmem:[#allocation2 + $0x38] sm:$0xff]
    %v54 = vld [vmem:[#allocation2 + $0x40] sm:$0xff]
    %v55 = vld [vmem:[#allocation2 + $0x48] sm:$0xff]
    %v56 = vld [vmem:[#allocation2 + $0x50] sm:$0xff]
    %v57 = vld [vmem:[#allocation2 + $0x58] sm:$0xff]
    %v58 = vld [vmem:[#allocation2 + $0x60] sm:$0xff]
    %v59 = vld [vmem:[#allocation2 + $0x68] sm:$0xff]
    %v60 = vld [vmem:[#allocation2 + $0x70] sm:$0xff]
    %v61 = vld [vmem:[#allocation2 + $0x78] sm:$0xff]
    %v62 = vld [vmem:[%s1] sm:$0xff]
    %v63 = vld [vmem:[%s1 + $0x8] sm:$0xff]
    %v64 = vld [vmem:[%s1 + $0x10] sm:$0xff]
    %v65 = vld [vmem:[%s1 + $0x18] sm:$0xff]
    %v66 = vld [vmem:[%s2] sm:$0xff]
    %v67 = vld [vmem:[%s2 + $0x8] sm:$0xff]
    %v68 = vld [vmem:[%s2 + $0x10] sm:$0xff]
    %v69 = vld [vmem:[%s2 + $0x18] sm:$0xff]
    %v70 = vld [vmem:[#allocation5] sm:$0xff]
    %v71 = vld [vmem:[#allocation5 + $0x8] sm:$0xff]
    %v72 = vadd.f32 %v46, %v47
    %73 = vadd.xlane.f32.xlu0 %v72
    %v74 = vpop.xlane.xlu0 %73
    %v75 = vadd.f32 %v48, %v49
    %76 = vadd.xlane.f32.xlu0 %v75
    %v77 = vpop.xlane.xlu0 %76
    %v78 = vadd.f32 %v50, %v51
    %79 = vadd.xlane.f32.xlu0 %v78
    %v80 = vpop.xlane.xlu0 %79
    %v81 = vadd.f32 %v52, %v53
    %82 = vadd.xlane.f32.xlu0 %v81
    %v83 = vpop.xlane.xlu0 %82
    %v84 = vadd.f32 %v54, %v55
    %85 = vadd.xlane.f32.xlu0 %v84
    %v86 = vpop.xlane.xlu0 %85
    %v87 = vadd.f32 %v56, %v57
    %88 = vadd.xlane.f32.xlu0 %v87
    %v89 = vpop.xlane.xlu0 %88
    %v90 = vadd.f32 %v58, %v59
    %91 = vadd.xlane.f32.xlu0 %v90
    %v92 = vpop.xlane.xlu0 %91
    %v93 = vadd.f32 %v60, %v61
    %94 = vadd.xlane.f32.xlu0 %v93
    %v95 = vpop.xlane.xlu0 %94
    %v96 = vrcp.pop 256.0
    %v97 = vmul.f32 %v74, %v96
    %v98 = vmul.f32 %v77, %v96
    %v99 = vmul.f32 %v80, %v96
    %v100 = vmul.f32 %v83, %v96
    %v101 = vmul.f32 %v86, %v96
    %v102 = vmul.f32 %v89, %v96
    %v103 = vmul.f32 %v92, %v96
    %v104 = vmul.f32 %v95, %v96
    %v105 = vmax.f32 %v46, %v47
    %106 = vmax.xlane.f32.xlu0 %v105
    %v107 = vpop.xlane.xlu0 %106
    %v108 = vmax.f32 %v48, %v49
    %109 = vmax.xlane.f32.xlu0 %v108
    %v110 = vpop.xlane.xlu0 %109
    %v111 = vmax.f32 %v50, %v51
    %112 = vmax.xlane.f32.xlu0 %v111
    %v113 = vpop.xlane.xlu0 %112
    %v114 = vmax.f32 %v52, %v53
    %115 = vmax.xlane.f32.xlu0 %v114
    %v116 = vpop.xlane.xlu0 %115
    %v117 = vmax.f32 %v54, %v55
    %118 = vmax.xlane.f32.xlu0 %v117
    %v119 = vpop.xlane.xlu0 %118
    %v120 = vmax.f32 %v56, %v57
    %121 = vmax.xlane.f32.xlu0 %v120
    %v122 = vpop.xlane.xlu0 %121
    %v123 = vmax.f32 %v58, %v59
    %124 = vmax.xlane.f32.xlu0 %v123
    %v125 = vpop.xlane.xlu0 %124
    %v126 = vmax.f32 %v60, %v61
    %127 = vmax.xlane.f32.xlu0 %v126
    %v128 = vpop.xlane.xlu0 %127
    %v129 = vmul.f32 %v97, %v62
    %v130 = vmul.f32 %v98, %v63
    %v131 = vmul.f32 %v99, %v64
    %v132 = vmul.f32 %v100, %v65
    %v133 = vmul.f32 %v101, %v62
    %v134 = vmul.f32 %v102, %v63
    %v135 = vmul.f32 %v103, %v64
    %v136 = vmul.f32 %v104, %v65
    %vm137 = vcmask 15360
    %v138 = vsel %vm137, %v129, 0.0
    %v139 = vsel %vm137, %v130, 0.0
    %v140 = vadd.f32 %v138, %v139
    %v141 = vsel %vm137, %v131, 0.0
    %v142 = vadd.f32 %v140, %v141
    %v143 = vsel %vm137, %v132, 0.0
    %v144 = vadd.f32 %v142, %v143
    %v145 = vrot.slane %v144, 4
    %v146 = vadd.f32 %v144, %v145
    %v147 = vrot.slane %v146, 2
    %v148 = vadd.f32 %v146, %v147
    %v149 = vrot.slane %v148, 1
    %v150 = vadd.f32 %v148, %v149
    %v151 = vsel %vm137, %v133, 0.0
    %v152 = vsel %vm137, %v134, 0.0
    %v153 = vadd.f32 %v151, %v152
    %v154 = vsel %vm137, %v135, 0.0
    %v155 = vadd.f32 %v153, %v154
    %v156 = vsel %vm137, %v136, 0.0
    %v157 = vadd.f32 %v155, %v156
    %v158 = vrot.slane %v157, 4
    %v159 = vadd.f32 %v157, %v158
    %v160 = vrot.slane %v159, 2
    %v161 = vadd.f32 %v159, %v160
    %v162 = vrot.slane %v161, 1
    %v163 = vadd.f32 %v161, %v162
    %v164 = vmul.f32 %v107, %v62
    %v165 = vmul.f32 %v110, %v63
    %v166 = vmul.f32 %v113, %v64
    %v167 = vmul.f32 %v116, %v65
    %v168 = vmul.f32 %v119, %v62
    %v169 = vmul.f32 %v122, %v63
    %v170 = vmul.f32 %v125, %v64
    %v171 = vmul.f32 %v128, %v65
    %v172 = vsel %vm137, %v164, 0.0
    %v173 = vsel %vm137, %v165, 0.0
    %v174 = vadd.f32 %v172, %v173
    %v175 = vsel %vm137, %v166, 0.0
    %v176 = vadd.f32 %v174, %v175
    %v177 = vsel %vm137, %v167, 0.0
    %v178 = vadd.f32 %v176, %v177
    %v179 = vrot.slane %v178, 4
    %v180 = vadd.f32 %v178, %v179
    %v181 = vrot.slane %v180, 2
    %v182 = vadd.f32 %v180, %v181
    %v183 = vrot.slane %v182, 1
    %v184 = vadd.f32 %v182, %v183
    %v185 = vsel %vm137, %v168, 0.0
    %v186 = vsel %vm137, %v169, 0.0
    %v187 = vadd.f32 %v185, %v186
    %v188 = vsel %vm137, %v170, 0.0
    %v189 = vadd.f32 %v187, %v188
    %v190 = vsel %vm137, %v171, 0.0
    %v191 = vadd.f32 %v189, %v190
    %v192 = vrot.slane %v191, 4
    %v193 = vadd.f32 %v191, %v192
    %v194 = vrot.slane %v193, 2
    %v195 = vadd.f32 %v193, %v194
    %v196 = vrot.slane %v195, 1
    %v197 = vadd.f32 %v195, %v196
    %v198 = vmax.f32 %v150, 0.0
    %v199 = vmax.f32 %v163, 0.0
    %v200 = vmax.f32 %v184, 0.0
    %v201 = vmax.f32 %v197, 0.0
    %v202 = vadd.f32 %v198, %v200
    %v203 = vadd.f32 %v199, %v201
    %206 = vrot.lane.b32.xlu0 %v202, 2
    %v207 = vpop.permute.xlu0 %206
    %208 = vrot.lane.b32.xlu0 %v203, 2
    %v209 = vpop.permute.xlu0 %208
    %v212 = vmul.f32 %v62, %v207
    %v213 = vmul.f32 %v63, %v207
    %v214 = vmul.f32 %v64, %v207
    %v215 = vmul.f32 %v65, %v207
    %v216 = vmul.f32 %v62, %v209
    %v217 = vmul.f32 %v63, %v209
    %v218 = vmul.f32 %v64, %v209
    %v219 = vmul.f32 %v65, %v209
    %228 = vrot.lane.b32.xlu0 %v212, 126
    %v229 = vpop.permute.xlu0 %228
    %230 = vrot.lane.b32.xlu0 %v213, 126
    %v231 = vpop.permute.xlu0 %230
    %232 = vrot.lane.b32.xlu0 %v214, 126
    %v233 = vpop.permute.xlu0 %232
    %234 = vrot.lane.b32.xlu0 %v215, 126
    %v235 = vpop.permute.xlu0 %234
    %236 = vrot.lane.b32.xlu0 %v216, 126
    %v237 = vpop.permute.xlu0 %236
    %238 = vrot.lane.b32.xlu0 %v217, 126
    %v239 = vpop.permute.xlu0 %238
    %240 = vrot.lane.b32.xlu0 %v218, 126
    %v241 = vpop.permute.xlu0 %240
    %242 = vrot.lane.b32.xlu0 %v219, 126
    %v243 = vpop.permute.xlu0 %242
    %v252 = vsel %vm137, %v229, 0.0
    %253 = vadd.xlane.f32.xlu0 %v252
    %v254 = vpop.xlane.xlu0 %253
    %v255 = vsel %vm137, %v231, 0.0
    %256 = vadd.xlane.f32.xlu0 %v255
    %v257 = vpop.xlane.xlu0 %256
    %v258 = vsel %vm137, %v233, 0.0
    %259 = vadd.xlane.f32.xlu0 %v258
    %v260 = vpop.xlane.xlu0 %259
    %v261 = vsel %vm137, %v235, 0.0
    %262 = vadd.xlane.f32.xlu0 %v261
    %v263 = vpop.xlane.xlu0 %262
    %v264 = vsel %vm137, %v237, 0.0
    %265 = vadd.xlane.f32.xlu0 %v264
    %v266 = vpop.xlane.xlu0 %265
    %v267 = vsel %vm137, %v239, 0.0
    %268 = vadd.xlane.f32.xlu0 %v267
    %v269 = vpop.xlane.xlu0 %268
    %v270 = vsel %vm137, %v241, 0.0
    %271 = vadd.xlane.f32.xlu0 %v270
    %v272 = vpop.xlane.xlu0 %271
    %v273 = vsel %vm137, %v243, 0.0
    %274 = vadd.xlane.f32.xlu0 %v273
    %v275 = vpop.xlane.xlu0 %274
    %v276 = vxor.u32 %v254, 2147483648
    %v277 = vxor.u32 %v257, 2147483648
    %v278 = vxor.u32 %v260, 2147483648
    %v279 = vxor.u32 %v263, 2147483648
    %v280 = vxor.u32 %v266, 2147483648
    %v281 = vxor.u32 %v269, 2147483648
    %v282 = vxor.u32 %v272, 2147483648
    %v283 = vxor.u32 %v275, 2147483648
    %v284 = vmul.f32 %v276, 1.442695
    %v285 = vpow.pop %v284
    %v286 = vmul.f32 %v277, 1.442695
    %v287 = vpow.pop %v286
    %v288 = vmul.f32 %v278, 1.442695
    %v289 = vpow.pop %v288
    %v290 = vmul.f32 %v279, 1.442695
    %v291 = vpow.pop %v290
    %v292 = vmul.f32 %v280, 1.442695
    %v293 = vpow.pop %v292
    %v294 = vmul.f32 %v281, 1.442695
    %v295 = vpow.pop %v294
    %v296 = vmul.f32 %v282, 1.442695
    %v297 = vpow.pop %v296
    %v298 = vmul.f32 %v283, 1.442695
    %v299 = vpow.pop %v298
    %v300 = vadd.f32 %v285, 1.0
    %v301 = vadd.f32 %v287, 1.0
    %v302 = vadd.f32 %v289, 1.0
    %v303 = vadd.f32 %v291, 1.0
    %v304 = vadd.f32 %v293, 1.0
    %v305 = vadd.f32 %v295, 1.0
    %v306 = vadd.f32 %v297, 1.0
    %v307 = vadd.f32 %v299, 1.0
    %v308 = vrcp.pop %v300
    %v309 = vmul.f32 1.0, %v308
    %v310 = vrcp.pop %v301
    %v311 = vmul.f32 1.0, %v310
    %v312 = vrcp.pop %v302
    %v313 = vmul.f32 1.0, %v312
    %v314 = vrcp.pop %v303
    %v315 = vmul.f32 1.0, %v314
    %v316 = vrcp.pop %v304
    %v317 = vmul.f32 1.0, %v316
    %v318 = vrcp.pop %v305
    %v319 = vmul.f32 1.0, %v318
    %v320 = vrcp.pop %v306
    %v321 = vmul.f32 1.0, %v320
    %v322 = vrcp.pop %v307
    %v323 = vmul.f32 1.0, %v322
    %v324 = vmul.f32 %v46, %v309
    %v325 = vmul.f32 %v47, %v309
    %v326 = vmul.f32 %v48, %v311
    %v327 = vmul.f32 %v49, %v311
    %v328 = vmul.f32 %v50, %v313
    %v329 = vmul.f32 %v51, %v313
    %v330 = vmul.f32 %v52, %v315
    %v331 = vmul.f32 %v53, %v315
    %v332 = vmul.f32 %v54, %v317
    %v333 = vmul.f32 %v55, %v317
    %v334 = vmul.f32 %v56, %v319
    %v335 = vmul.f32 %v57, %v319
    %v336 = vmul.f32 %v58, %v321
    %v337 = vmul.f32 %v59, %v321
    %v338 = vmul.f32 %v60, %v323
    %v339 = vmul.f32 %v61, %v323
    %v340 = vadd.f32 %v324, %v326
    %v341 = vadd.f32 %v340, %v328
    %v342 = vadd.f32 %v341, %v330
    %v343 = vrot.slane %v342, 4
    %v344 = vadd.f32 %v342, %v343
    %v345 = vrot.slane %v344, 2
    %v346 = vadd.f32 %v344, %v345
    %v347 = vrot.slane %v346, 1
    %v348 = vadd.f32 %v346, %v347
    %v349 = vadd.f32 %v325, %v327
    %v350 = vadd.f32 %v349, %v329
    %v351 = vadd.f32 %v350, %v331
    %v352 = vrot.slane %v351, 4
    %v353 = vadd.f32 %v351, %v352
    %v354 = vrot.slane %v353, 2
    %v355 = vadd.f32 %v353, %v354
    %v356 = vrot.slane %v355, 1
    %v357 = vadd.f32 %v355, %v356
    %v358 = vadd.f32 %v332, %v334
    %v359 = vadd.f32 %v358, %v336
    %v360 = vadd.f32 %v359, %v338
    %v361 = vrot.slane %v360, 4
    %v362 = vadd.f32 %v360, %v361
    %v363 = vrot.slane %v362, 2
    %v364 = vadd.f32 %v362, %v363
    %v365 = vrot.slane %v364, 1
    %v366 = vadd.f32 %v364, %v365
    %v367 = vadd.f32 %v333, %v335
    %v368 = vadd.f32 %v367, %v337
    %v369 = vadd.f32 %v368, %v339
    %v370 = vrot.slane %v369, 4
    %v371 = vadd.f32 %v369, %v370
    %v372 = vrot.slane %v371, 2
    %v373 = vadd.f32 %v371, %v372
    %v374 = vrot.slane %v373, 1
    %v375 = vadd.f32 %v373, %v374
    %v376 = vrcp.pop 32.0
    %v377 = vmul.f32 %v348, %v376
    %v378 = vmul.f32 %v357, %v376
    %v379 = vmul.f32 %v366, %v376
    %v380 = vmul.f32 %v375, %v376
    %v381 = vmax.f32 %v324, %v326
    %v382 = vmax.f32 %v381, %v328
    %v383 = vmax.f32 %v382, %v330
    %v384 = vrot.slane %v383, 4
    %v385 = vmax.f32 %v383, %v384
    %v386 = vrot.slane %v385, 2
    %v387 = vmax.f32 %v385, %v386
    %v388 = vrot.slane %v387, 1
    %v389 = vmax.f32 %v387, %v388
    %v390 = vmax.f32 %v325, %v327
    %v391 = vmax.f32 %v390, %v329
    %v392 = vmax.f32 %v391, %v331
    %v393 = vrot.slane %v392, 4
    %v394 = vmax.f32 %v392, %v393
    %v395 = vrot.slane %v394, 2
    %v396 = vmax.f32 %v394, %v395
    %v397 = vrot.slane %v396, 1
    %v398 = vmax.f32 %v396, %v397
    %v399 = vmax.f32 %v332, %v334
    %v400 = vmax.f32 %v399, %v336
    %v401 = vmax.f32 %v400, %v338
    %v402 = vrot.slane %v401, 4
    %v403 = vmax.f32 %v401, %v402
    %v404 = vrot.slane %v403, 2
    %v405 = vmax.f32 %v403, %v404
    %v406 = vrot.slane %v405, 1
    %v407 = vmax.f32 %v405, %v406
    %v408 = vmax.f32 %v333, %v335
    %v409 = vmax.f32 %v408, %v337
    %v410 = vmax.f32 %v409, %v339
    %v411 = vrot.slane %v410, 4
    %v412 = vmax.f32 %v410, %v411
    %v413 = vrot.slane %v412, 2
    %v414 = vmax.f32 %v412, %v413
    %v415 = vrot.slane %v414, 1
    %v416 = vmax.f32 %v414, %v415
    %417 = vrot.lane.b32.xlu0 %v377, 3
    %v418 = vpop.permute.xlu0 %417
    %419 = vrot.lane.b32.xlu0 %v378, 3
    %v420 = vpop.permute.xlu0 %419
    %v421 = vlaneseq
    %v422 = vand.u32 %v421, 127
    %vm423 = vcmp.lt.s32.totalorder %v422, 3
    %v424 = vsel %vm423, %v418, %v420
    %v425 = vsel %vm423, %v420, %v418
    %v426 = vmul.f32 %v425, %v66
    %v427 = vmul.f32 %v424, %v67
    %429 = vset.pattern.permute.xlu0 0
    %430 = vperm.xlu0 %429, %v70
    %v431 = vpop.permute.xlu0 %430
    %v433 = vlaneseq
    %v434 = vshrl.u32 %v433, 7
    %v435 = vsub.s32 0, %v434
    %v436 = vrot.slane %v426, %v435
    %v437 = vlaneseq
    %v438 = vshrl.u32 %v437, 7
    %v439 = vsub.s32 0, %v438
    %v440 = vrot.slane %v427, %v439
    %v441 = vmul.f32 %v431, %v436
    %v442 = vmul.f32 %v431, %v440
    %v443 = vadd.f32 %v441, 0.0
    %v444 = vadd.f32 %v442, 0.0
    %445 = vrot.lane.b32.xlu0 %v389, 3
    %v446 = vpop.permute.xlu0 %445
    %447 = vrot.lane.b32.xlu0 %v398, 3
    %v448 = vpop.permute.xlu0 %447
    %v449 = vsel %vm423, %v446, %v448
    %v450 = vsel %vm423, %v448, %v446
    %v451 = vmul.f32 %v450, %v66
    %v452 = vmul.f32 %v449, %v67
    %454 = vset.pattern.permute.xlu0 0
    %455 = vperm.xlu0 %454, %v71
    %v456 = vpop.permute.xlu0 %455
    %v458 = vlaneseq
    %v459 = vshrl.u32 %v458, 7
    %v460 = vsub.s32 0, %v459
    %v461 = vrot.slane %v451, %v460
    %v462 = vlaneseq
    %v463 = vshrl.u32 %v462, 7
    %v464 = vsub.s32 0, %v463
    %v465 = vrot.slane %v452, %v464
    %v466 = vmul.f32 %v456, %v461
    %v467 = vmul.f32 %v456, %v465
    %v468 = vadd.f32 %v443, %v466
    %v469 = vadd.f32 %v444, %v467
    %470 = vrot.lane.b32.xlu0 %v377, 2
    %v471 = vpop.permute.xlu0 %470
    %472 = vrot.lane.b32.xlu0 %v378, 2
    %v473 = vpop.permute.xlu0 %472
    %vm474 = vcmp.lt.s32.totalorder %v422, 2
    %v475 = vsel %vm474, %v471, %v473
    %v476 = vsel %vm474, %v473, %v471
    %v479 = vrot.slane %v66, 1
    %v480 = vrot.slane %v67, 1
    %v483 = vmul.f32 %v476, %v479
    %v484 = vmul.f32 %v475, %v480
    %485 = vset.pattern.permute.xlu0 1
    %486 = vperm.xlu0 %485, %v70
    %v487 = vpop.permute.xlu0 %486
    %v489 = vlaneseq
    %v490 = vshrl.u32 %v489, 7
    %v491 = vsub.s32 0, %v490
    %v492 = vrot.slane %v483, %v491
    %v493 = vlaneseq
    %v494 = vshrl.u32 %v493, 7
    %v495 = vsub.s32 0, %v494
    %v496 = vrot.slane %v484, %v495
    %v497 = vmul.f32 %v487, %v492
    %v498 = vmul.f32 %v487, %v496
    %v499 = vadd.f32 %v468, %v497
    %v500 = vadd.f32 %v469, %v498
    %501 = vrot.lane.b32.xlu0 %v389, 2
    %v502 = vpop.permute.xlu0 %501
    %503 = vrot.lane.b32.xlu0 %v398, 2
    %v504 = vpop.permute.xlu0 %503
    %v505 = vsel %vm474, %v502, %v504
    %v506 = vsel %vm474, %v504, %v502
    %v507 = vmul.f32 %v506, %v479
    %v508 = vmul.f32 %v505, %v480
    %509 = vset.pattern.permute.xlu0 1
    %510 = vperm.xlu0 %509, %v71
    %v511 = vpop.permute.xlu0 %510
    %v513 = vlaneseq
    %v514 = vshrl.u32 %v513, 7
    %v515 = vsub.s32 0, %v514
    %v516 = vrot.slane %v507, %v515
    %v517 = vlaneseq
    %v518 = vshrl.u32 %v517, 7
    %v519 = vsub.s32 0, %v518
    %v520 = vrot.slane %v508, %v519
    %v521 = vmul.f32 %v511, %v516
    %v522 = vmul.f32 %v511, %v520
    %v523 = vadd.f32 %v499, %v521
    %v524 = vadd.f32 %v500, %v522
    %525 = vrot.lane.b32.xlu0 %v377, 1
    %v526 = vpop.permute.xlu0 %525
    %527 = vrot.lane.b32.xlu0 %v378, 1
    %v528 = vpop.permute.xlu0 %527
    %vm529 = vcmp.lt.s32.totalorder %v422, 1
    %v530 = vsel %vm529, %v526, %v528
    %v531 = vsel %vm529, %v528, %v526
    %v532 = vrot.slane %v66, 2
    %v533 = vrot.slane %v67, 2
    %v536 = vmul.f32 %v531, %v532
    %v537 = vmul.f32 %v530, %v533
    %538 = vset.pattern.permute.xlu0 2
    %539 = vperm.xlu0 %538, %v70
    %v540 = vpop.permute.xlu0 %539
    %v542 = vlaneseq
    %v543 = vshrl.u32 %v542, 7
    %v544 = vsub.s32 0, %v543
    %v545 = vrot.slane %v536, %v544
    %v546 = vlaneseq
    %v547 = vshrl.u32 %v546, 7
    %v548 = vsub.s32 0, %v547
    %v549 = vrot.slane %v537, %v548
    %v550 = vmul.f32 %v540, %v545
    %v551 = vmul.f32 %v540, %v549
    %v552 = vadd.f32 %v523, %v550
    %v553 = vadd.f32 %v524, %v551
    %554 = vrot.lane.b32.xlu0 %v389, 1
    %v555 = vpop.permute.xlu0 %554
    %556 = vrot.lane.b32.xlu0 %v398, 1
    %v557 = vpop.permute.xlu0 %556
    %v558 = vsel %vm529, %v555, %v557
    %v559 = vsel %vm529, %v557, %v555
    %v560 = vmul.f32 %v559, %v532
    %v561 = vmul.f32 %v558, %v533
    %562 = vset.pattern.permute.xlu0 2
    %563 = vperm.xlu0 %562, %v71
    %v564 = vpop.permute.xlu0 %563
    %v566 = vlaneseq
    %v567 = vshrl.u32 %v566, 7
    %v568 = vsub.s32 0, %v567
    %v569 = vrot.slane %v560, %v568
    %v570 = vlaneseq
    %v571 = vshrl.u32 %v570, 7
    %v572 = vsub.s32 0, %v571
    %v573 = vrot.slane %v561, %v572
    %v574 = vmul.f32 %v564, %v569
    %v575 = vmul.f32 %v564, %v573
    %v576 = vadd.f32 %v552, %v574
    %v577 = vadd.f32 %v553, %v575
    %v578 = vmul.f32 %v377, %v66
    %v579 = vmul.f32 %v378, %v67
    %580 = vset.pattern.permute.xlu0 3
    %581 = vperm.xlu0 %580, %v70
    %v582 = vpop.permute.xlu0 %581
    %v584 = vlaneseq
    %v585 = vshrl.u32 %v584, 7
    %v586 = vsub.s32 3, %v585
    %v587 = vrot.slane %v578, %v586
    %v588 = vlaneseq
    %v589 = vshrl.u32 %v588, 7
    %v590 = vsub.s32 3, %v589
    %v591 = vrot.slane %v579, %v590
    %v592 = vmul.f32 %v582, %v587
    %v593 = vmul.f32 %v582, %v591
    %v594 = vadd.f32 %v576, %v592
    %v595 = vadd.f32 %v577, %v593
    %v596 = vmul.f32 %v389, %v66
    %v597 = vmul.f32 %v398, %v67
    %598 = vset.pattern.permute.xlu0 3
    %599 = vperm.xlu0 %598, %v71
    %v600 = vpop.permute.xlu0 %599
    %v602 = vlaneseq
    %v603 = vshrl.u32 %v602, 7
    %v604 = vsub.s32 3, %v603
    %v605 = vrot.slane %v596, %v604
    %v606 = vlaneseq
    %v607 = vshrl.u32 %v606, 7
    %v608 = vsub.s32 3, %v607
    %v609 = vrot.slane %v597, %v608
    %v610 = vmul.f32 %v600, %v605
    %v611 = vmul.f32 %v600, %v609
    %v612 = vadd.f32 %v594, %v610
    %v613 = vadd.f32 %v595, %v611
    %614 = vrot.lane.b32.xlu0 %v377, 127
    %v615 = vpop.permute.xlu0 %614
    %616 = vrot.lane.b32.xlu0 %v378, 127
    %v617 = vpop.permute.xlu0 %616
    %vm618 = vcmp.lt.s32.totalorder %v422, 127
    %v619 = vsel %vm618, %v615, %v617
    %v620 = vsel %vm618, %v617, %v615
    %v621 = vrot.slane %v66, 4
    %v622 = vrot.slane %v67, 4
    %v625 = vmul.f32 %v619, %v621
    %v626 = vmul.f32 %v620, %v622
    %627 = vset.pattern.permute.xlu0 4
    %628 = vperm.xlu0 %627, %v70
    %v629 = vpop.permute.xlu0 %628
    %v631 = vlaneseq
    %v632 = vshrl.u32 %v631, 7
    %v633 = vsub.s32 0, %v632
    %v634 = vrot.slane %v625, %v633
    %v635 = vlaneseq
    %v636 = vshrl.u32 %v635, 7
    %v637 = vsub.s32 0, %v636
    %v638 = vrot.slane %v626, %v637
    %v639 = vmul.f32 %v629, %v634
    %v640 = vmul.f32 %v629, %v638
    %v641 = vadd.f32 %v612, %v639
    %v642 = vadd.f32 %v613, %v640
    %643 = vrot.lane.b32.xlu0 %v389, 127
    %v644 = vpop.permute.xlu0 %643
    %645 = vrot.lane.b32.xlu0 %v398, 127
    %v646 = vpop.permute.xlu0 %645
    %v647 = vsel %vm618, %v644, %v646
    %v648 = vsel %vm618, %v646, %v644
    %v649 = vmul.f32 %v647, %v621
    %v650 = vmul.f32 %v648, %v622
    %651 = vset.pattern.permute.xlu0 4
    %652 = vperm.xlu0 %651, %v71
    %v653 = vpop.permute.xlu0 %652
    %v655 = vlaneseq
    %v656 = vshrl.u32 %v655, 7
    %v657 = vsub.s32 0, %v656
    %v658 = vrot.slane %v649, %v657
    %v659 = vlaneseq
    %v660 = vshrl.u32 %v659, 7
    %v661 = vsub.s32 0, %v660
    %v662 = vrot.slane %v650, %v661
    %v663 = vmul.f32 %v653, %v658
    %v664 = vmul.f32 %v653, %v662
    %v665 = vadd.f32 %v641, %v663
    %v666 = vadd.f32 %v642, %v664
    %667 = vrot.lane.b32.xlu0 %v377, 126
    %v668 = vpop.permute.xlu0 %667
    %669 = vrot.lane.b32.xlu0 %v378, 126
    %v670 = vpop.permute.xlu0 %669
    %vm671 = vcmp.lt.s32.totalorder %v422, 126
    %v672 = vsel %vm671, %v668, %v670
    %v673 = vsel %vm671, %v670, %v668
    %v674 = vrot.slane %v66, 5
    %v675 = vrot.slane %v67, 5
    %v678 = vmul.f32 %v672, %v674
    %v679 = vmul.f32 %v673, %v675
    %680 = vset.pattern.permute.xlu0 5
    %681 = vperm.xlu0 %680, %v70
    %v682 = vpop.permute.xlu0 %681
    %v684 = vlaneseq
    %v685 = vshrl.u32 %v684, 7
    %v686 = vsub.s32 0, %v685
    %v687 = vrot.slane %v678, %v686
    %v688 = vlaneseq
    %v689 = vshrl.u32 %v688, 7
    %v690 = vsub.s32 0, %v689
    %v691 = vrot.slane %v679, %v690
    %v692 = vmul.f32 %v682, %v687
    %v693 = vmul.f32 %v682, %v691
    %v694 = vadd.f32 %v665, %v692
    %v695 = vadd.f32 %v666, %v693
    %696 = vrot.lane.b32.xlu0 %v389, 126
    %v697 = vpop.permute.xlu0 %696
    %698 = vrot.lane.b32.xlu0 %v398, 126
    %v699 = vpop.permute.xlu0 %698
    %v700 = vsel %vm671, %v697, %v699
    %v701 = vsel %vm671, %v699, %v697
    %v702 = vmul.f32 %v700, %v674
    %v703 = vmul.f32 %v701, %v675
    %704 = vset.pattern.permute.xlu0 5
    %705 = vperm.xlu0 %704, %v71
    %v706 = vpop.permute.xlu0 %705
    %v708 = vlaneseq
    %v709 = vshrl.u32 %v708, 7
    %v710 = vsub.s32 0, %v709
    %v711 = vrot.slane %v702, %v710
    %v712 = vlaneseq
    %v713 = vshrl.u32 %v712, 7
    %v714 = vsub.s32 0, %v713
    %v715 = vrot.slane %v703, %v714
    %v716 = vmul.f32 %v706, %v711
    %v717 = vmul.f32 %v706, %v715
    %v718 = vadd.f32 %v694, %v716
    %v719 = vadd.f32 %v695, %v717
    %720 = vrot.lane.b32.xlu0 %v377, 125
    %v721 = vpop.permute.xlu0 %720
    %722 = vrot.lane.b32.xlu0 %v378, 125
    %v723 = vpop.permute.xlu0 %722
    %vm724 = vcmp.lt.s32.totalorder %v422, 125
    %v725 = vsel %vm724, %v721, %v723
    %v726 = vsel %vm724, %v723, %v721
    %v727 = vrot.slane %v66, 6
    %v728 = vrot.slane %v67, 6
    %v731 = vmul.f32 %v725, %v727
    %v732 = vmul.f32 %v726, %v728
    %733 = vset.pattern.permute.xlu0 6
    %734 = vperm.xlu0 %733, %v70
    %v735 = vpop.permute.xlu0 %734
    %v737 = vlaneseq
    %v738 = vshrl.u32 %v737, 7
    %v739 = vsub.s32 0, %v738
    %v740 = vrot.slane %v731, %v739
    %v741 = vlaneseq
    %v742 = vshrl.u32 %v741, 7
    %v743 = vsub.s32 0, %v742
    %v744 = vrot.slane %v732, %v743
    %v745 = vmul.f32 %v735, %v740
    %v746 = vmul.f32 %v735, %v744
    %v747 = vadd.f32 %v718, %v745
    %v748 = vadd.f32 %v719, %v746
    %749 = vrot.lane.b32.xlu0 %v389, 125
    %v750 = vpop.permute.xlu0 %749
    %751 = vrot.lane.b32.xlu0 %v398, 125
    %v752 = vpop.permute.xlu0 %751
    %v753 = vsel %vm724, %v750, %v752
    %v754 = vsel %vm724, %v752, %v750
    %v755 = vmul.f32 %v753, %v727
    %v756 = vmul.f32 %v754, %v728
    %757 = vset.pattern.permute.xlu0 6
    %758 = vperm.xlu0 %757, %v71
    %v759 = vpop.permute.xlu0 %758
    %v761 = vlaneseq
    %v762 = vshrl.u32 %v761, 7
    %v763 = vsub.s32 0, %v762
    %v764 = vrot.slane %v755, %v763
    %v765 = vlaneseq
    %v766 = vshrl.u32 %v765, 7
    %v767 = vsub.s32 0, %v766
    %v768 = vrot.slane %v756, %v767
    %v769 = vmul.f32 %v759, %v764
    %v770 = vmul.f32 %v759, %v768
    %v771 = vadd.f32 %v747, %v769
    %v772 = vadd.f32 %v748, %v770
    %773 = vrot.lane.b32.xlu0 %v771, 48
    %v774 = vpop.permute.xlu0 %773
    %775 = vrot.lane.b32.xlu0 %v772, 48
    %v776 = vpop.permute.xlu0 %775
    %vm777 = vcmp.lt.s32.totalorder %v422, 48
    %v778 = vsel %vm777, %v774, %v776
    %v779 = vsel %vm777, %v776, %v774
    %v780 = vmul.f32 %v779, %v68
    %v781 = vmul.f32 %v778, %v69
    %v782 = vadd.f32 %v780, 0.0
    %v783 = vadd.f32 %v781, 0.0
    %v786 = vrot.slane %v771, 1
    %v787 = vrot.slane %v772, 1
    %790 = vrot.lane.b32.xlu0 %v786, 32
    %v791 = vpop.permute.xlu0 %790
    %792 = vrot.lane.b32.xlu0 %v787, 32
    %v793 = vpop.permute.xlu0 %792
    %vm794 = vcmp.lt.s32.totalorder %v422, 32
    %v795 = vsel %vm794, %v791, %v793
    %v796 = vsel %vm794, %v793, %v791
    %v799 = vrot.slane %v68, 1
    %v800 = vrot.slane %v69, 1
    %v803 = vmul.f32 %v796, %v799
    %v804 = vmul.f32 %v795, %v800
    %v805 = vadd.f32 %v782, %v803
    %v806 = vadd.f32 %v783, %v804
    %v807 = vrot.slane %v771, 2
    %v808 = vrot.slane %v772, 2
    %811 = vrot.lane.b32.xlu0 %v807, 16
    %v812 = vpop.permute.xlu0 %811
    %813 = vrot.lane.b32.xlu0 %v808, 16
    %v814 = vpop.permute.xlu0 %813
    %vm815 = vcmp.lt.s32.totalorder %v422, 16
    %v816 = vsel %vm815, %v812, %v814
    %v817 = vsel %vm815, %v814, %v812
    %v818 = vrot.slane %v68, 2
    %v819 = vrot.slane %v69, 2
    %v822 = vmul.f32 %v817, %v818
    %v823 = vmul.f32 %v816, %v819
    %v824 = vadd.f32 %v805, %v822
    %v825 = vadd.f32 %v806, %v823
    %v826 = vmul.f32 %v771, %v68
    %v827 = vmul.f32 %v772, %v69
    %v830 = vrot.slane %v826, 3
    %v831 = vrot.slane %v827, 3
    %v834 = vadd.f32 %v824, %v830
    %v835 = vadd.f32 %v825, %v831
    %v836 = vrot.slane %v771, 4
    %v837 = vrot.slane %v772, 4
    %840 = vrot.lane.b32.xlu0 %v836, 112
    %v841 = vpop.permute.xlu0 %840
    %842 = vrot.lane.b32.xlu0 %v837, 112
    %v843 = vpop.permute.xlu0 %842
    %vm844 = vcmp.lt.s32.totalorder %v422, 112
    %v845 = vsel %vm844, %v841, %v843
    %v846 = vsel %vm844, %v843, %v841
    %v847 = vrot.slane %v68, 4
    %v848 = vrot.slane %v69, 4
    %v851 = vmul.f32 %v845, %v847
    %v852 = vmul.f32 %v846, %v848
    %v853 = vadd.f32 %v834, %v851
    %v854 = vadd.f32 %v835, %v852
    %v855 = vrot.slane %v771, 5
    %v856 = vrot.slane %v772, 5
    %859 = vrot.lane.b32.xlu0 %v855, 96
    %v860 = vpop.permute.xlu0 %859
    %861 = vrot.lane.b32.xlu0 %v856, 96
    %v862 = vpop.permute.xlu0 %861
    %vm863 = vcmp.lt.s32.totalorder %v422, 96
    %v864 = vsel %vm863, %v860, %v862
    %v865 = vsel %vm863, %v862, %v860
    %v866 = vrot.slane %v68, 5
    %v867 = vrot.slane %v69, 5
    %v870 = vmul.f32 %v864, %v866
    %v871 = vmul.f32 %v865, %v867
    %v872 = vadd.f32 %v853, %v870
    %v873 = vadd.f32 %v854, %v871
    %v874 = vrot.slane %v771, 6
    %v875 = vrot.slane %v772, 6
    %878 = vrot.lane.b32.xlu0 %v874, 80
    %v879 = vpop.permute.xlu0 %878
    %880 = vrot.lane.b32.xlu0 %v875, 80
    %v881 = vpop.permute.xlu0 %880
    %vm882 = vcmp.lt.s32.totalorder %v422, 80
    %v883 = vsel %vm882, %v879, %v881
    %v884 = vsel %vm882, %v881, %v879
    %v885 = vrot.slane %v68, 6
    %v886 = vrot.slane %v69, 6
    %v889 = vmul.f32 %v883, %v885
    %v890 = vmul.f32 %v884, %v886
    %v891 = vadd.f32 %v872, %v889
    %v892 = vadd.f32 %v873, %v890
    %v893 = vxor.u32 %v891, 2147483648
    %v894 = vxor.u32 %v892, 2147483648
    %v895 = vmul.f32 %v893, 1.442695
    %v896 = vpow.pop %v895
    %v897 = vmul.f32 %v894, 1.442695
    %v898 = vpow.pop %v897
    %v899 = vadd.f32 %v896, 1.0
    %v900 = vadd.f32 %v898, 1.0
    %v901 = vrcp.pop %v899
    %v902 = vmul.f32 1.0, %v901
    %v903 = vrcp.pop %v900
    %v904 = vmul.f32 1.0, %v903
    %v905 = vlaneseq
    %v906 = vshrl.u32 %v905, 7
    %v907 = vsub.s32 0, %v906
    %v908 = vrot.slane %v902, %v907
    %v909 = vlaneseq
    %v910 = vshrl.u32 %v909, 7
    %v911 = vsub.s32 0, %v910
    %v912 = vrot.slane %v904, %v911
    %v913 = vmul.f32 %v324, %v908
    %v914 = vmul.f32 %v325, %v912
    %v915 = vmul.f32 %v326, %v908
    %v916 = vmul.f32 %v327, %v912
    %v917 = vmul.f32 %v328, %v908
    %v918 = vmul.f32 %v329, %v912
    %v919 = vmul.f32 %v330, %v908
    %v920 = vmul.f32 %v331, %v912
    %921 = vst [vmem:[#allocation7] sm:$0xff] %v913
    %922 = vst [vmem:[#allocation7 + $0x8] sm:$0xff] %v914
    %923 = vst [vmem:[#allocation7 + $0x10] sm:$0xff] %v915
    %924 = vst [vmem:[#allocation7 + $0x18] sm:$0xff] %v916
    %925 = vst [vmem:[#allocation7 + $0x20] sm:$0xff] %v917
    %926 = vst [vmem:[#allocation7 + $0x28] sm:$0xff] %v918
    %927 = vst [vmem:[#allocation7 + $0x30] sm:$0xff] %v919
    %928 = vst [vmem:[#allocation7 + $0x38] sm:$0xff] %v920
    %929 = vrot.lane.b32.xlu0 %v379, 3
    %v930 = vpop.permute.xlu0 %929
    %931 = vrot.lane.b32.xlu0 %v380, 3
    %v932 = vpop.permute.xlu0 %931
    %v933 = vsel %vm423, %v930, %v932
    %v934 = vsel %vm423, %v932, %v930
    %v935 = vmul.f32 %v934, %v66
    %v936 = vmul.f32 %v933, %v67
    %v937 = vlaneseq
    %v938 = vshrl.u32 %v937, 7
    %v939 = vsub.s32 0, %v938
    %v940 = vrot.slane %v935, %v939
    %v941 = vlaneseq
    %v942 = vshrl.u32 %v941, 7
    %v943 = vsub.s32 0, %v942
    %v944 = vrot.slane %v936, %v943
    %v945 = vmul.f32 %v431, %v940
    %v946 = vmul.f32 %v431, %v944
    %v947 = vadd.f32 %v945, 0.0
    %v948 = vadd.f32 %v946, 0.0
    %949 = vrot.lane.b32.xlu0 %v407, 3
    %v950 = vpop.permute.xlu0 %949
    %951 = vrot.lane.b32.xlu0 %v416, 3
    %v952 = vpop.permute.xlu0 %951
    %v953 = vsel %vm423, %v950, %v952
    %v954 = vsel %vm423, %v952, %v950
    %v955 = vmul.f32 %v954, %v66
    %v956 = vmul.f32 %v953, %v67
    %v957 = vlaneseq
    %v958 = vshrl.u32 %v957, 7
    %v959 = vsub.s32 0, %v958
    %v960 = vrot.slane %v955, %v959
    %v961 = vlaneseq
    %v962 = vshrl.u32 %v961, 7
    %v963 = vsub.s32 0, %v962
    %v964 = vrot.slane %v956, %v963
    %v965 = vmul.f32 %v456, %v960
    %v966 = vmul.f32 %v456, %v964
    %v967 = vadd.f32 %v947, %v965
    %v968 = vadd.f32 %v948, %v966
    %969 = vrot.lane.b32.xlu0 %v379, 2
    %v970 = vpop.permute.xlu0 %969
    %971 = vrot.lane.b32.xlu0 %v380, 2
    %v972 = vpop.permute.xlu0 %971
    %v973 = vsel %vm474, %v970, %v972
    %v974 = vsel %vm474, %v972, %v970
    %v975 = vmul.f32 %v974, %v479
    %v976 = vmul.f32 %v973, %v480
    %v977 = vlaneseq
    %v978 = vshrl.u32 %v977, 7
    %v979 = vsub.s32 0, %v978
    %v980 = vrot.slane %v975, %v979
    %v981 = vlaneseq
    %v982 = vshrl.u32 %v981, 7
    %v983 = vsub.s32 0, %v982
    %v984 = vrot.slane %v976, %v983
    %v985 = vmul.f32 %v487, %v980
    %v986 = vmul.f32 %v487, %v984
    %v987 = vadd.f32 %v967, %v985
    %v988 = vadd.f32 %v968, %v986
    %989 = vrot.lane.b32.xlu0 %v407, 2
    %v990 = vpop.permute.xlu0 %989
    %991 = vrot.lane.b32.xlu0 %v416, 2
    %v992 = vpop.permute.xlu0 %991
    %v993 = vsel %vm474, %v990, %v992
    %v994 = vsel %vm474, %v992, %v990
    %v995 = vmul.f32 %v994, %v479
    %v996 = vmul.f32 %v993, %v480
    %v997 = vlaneseq
    %v998 = vshrl.u32 %v997, 7
    %v999 = vsub.s32 0, %v998
    %v1000 = vrot.slane %v995, %v999
    %v1001 = vlaneseq
    %v1002 = vshrl.u32 %v1001, 7
    %v1003 = vsub.s32 0, %v1002
    %v1004 = vrot.slane %v996, %v1003
    %v1005 = vmul.f32 %v511, %v1000
    %v1006 = vmul.f32 %v511, %v1004
    %v1007 = vadd.f32 %v987, %v1005
    %v1008 = vadd.f32 %v988, %v1006
    %1009 = vrot.lane.b32.xlu0 %v379, 1
    %v1010 = vpop.permute.xlu0 %1009
    %1011 = vrot.lane.b32.xlu0 %v380, 1
    %v1012 = vpop.permute.xlu0 %1011
    %v1013 = vsel %vm529, %v1010, %v1012
    %v1014 = vsel %vm529, %v1012, %v1010
    %v1015 = vmul.f32 %v1014, %v532
    %v1016 = vmul.f32 %v1013, %v533
    %v1017 = vlaneseq
    %v1018 = vshrl.u32 %v1017, 7
    %v1019 = vsub.s32 0, %v1018
    %v1020 = vrot.slane %v1015, %v1019
    %v1021 = vlaneseq
    %v1022 = vshrl.u32 %v1021, 7
    %v1023 = vsub.s32 0, %v1022
    %v1024 = vrot.slane %v1016, %v1023
    %v1025 = vmul.f32 %v540, %v1020
    %v1026 = vmul.f32 %v540, %v1024
    %v1027 = vadd.f32 %v1007, %v1025
    %v1028 = vadd.f32 %v1008, %v1026
    %1029 = vrot.lane.b32.xlu0 %v407, 1
    %v1030 = vpop.permute.xlu0 %1029
    %1031 = vrot.lane.b32.xlu0 %v416, 1
    %v1032 = vpop.permute.xlu0 %1031
    %v1033 = vsel %vm529, %v1030, %v1032
    %v1034 = vsel %vm529, %v1032, %v1030
    %v1035 = vmul.f32 %v1034, %v532
    %v1036 = vmul.f32 %v1033, %v533
    %v1037 = vlaneseq
    %v1038 = vshrl.u32 %v1037, 7
    %v1039 = vsub.s32 0, %v1038
    %v1040 = vrot.slane %v1035, %v1039
    %v1041 = vlaneseq
    %v1042 = vshrl.u32 %v1041, 7
    %v1043 = vsub.s32 0, %v1042
    %v1044 = vrot.slane %v1036, %v1043
    %v1045 = vmul.f32 %v564, %v1040
    %v1046 = vmul.f32 %v564, %v1044
    %v1047 = vadd.f32 %v1027, %v1045
    %v1048 = vadd.f32 %v1028, %v1046
    %v1049 = vmul.f32 %v379, %v66
    %v1050 = vmul.f32 %v380, %v67
    %v1051 = vlaneseq
    %v1052 = vshrl.u32 %v1051, 7
    %v1053 = vsub.s32 3, %v1052
    %v1054 = vrot.slane %v1049, %v1053
    %v1055 = vlaneseq
    %v1056 = vshrl.u32 %v1055, 7
    %v1057 = vsub.s32 3, %v1056
    %v1058 = vrot.slane %v1050, %v1057
    %v1059 = vmul.f32 %v582, %v1054
    %v1060 = vmul.f32 %v582, %v1058
    %v1061 = vadd.f32 %v1047, %v1059
    %v1062 = vadd.f32 %v1048, %v1060
    %v1063 = vmul.f32 %v407, %v66
    %v1064 = vmul.f32 %v416, %v67
    %v1065 = vlaneseq
    %v1066 = vshrl.u32 %v1065, 7
    %v1067 = vsub.s32 3, %v1066
    %v1068 = vrot.slane %v1063, %v1067
    %v1069 = vlaneseq
    %v1070 = vshrl.u32 %v1069, 7
    %v1071 = vsub.s32 3, %v1070
    %v1072 = vrot.slane %v1064, %v1071
    %v1073 = vmul.f32 %v600, %v1068
    %v1074 = vmul.f32 %v600, %v1072
    %v1075 = vadd.f32 %v1061, %v1073
    %v1076 = vadd.f32 %v1062, %v1074
    %1077 = vrot.lane.b32.xlu0 %v379, 127
    %v1078 = vpop.permute.xlu0 %1077
    %1079 = vrot.lane.b32.xlu0 %v380, 127
    %v1080 = vpop.permute.xlu0 %1079
    %v1081 = vsel %vm618, %v1078, %v1080
    %v1082 = vsel %vm618, %v1080, %v1078
    %v1083 = vmul.f32 %v1081, %v621
    %v1084 = vmul.f32 %v1082, %v622
    %v1085 = vlaneseq
    %v1086 = vshrl.u32 %v1085, 7
    %v1087 = vsub.s32 0, %v1086
    %v1088 = vrot.slane %v1083, %v1087
    %v1089 = vlaneseq
    %v1090 = vshrl.u32 %v1089, 7
    %v1091 = vsub.s32 0, %v1090
    %v1092 = vrot.slane %v1084, %v1091
    %v1093 = vmul.f32 %v629, %v1088
    %v1094 = vmul.f32 %v629, %v1092
    %v1095 = vadd.f32 %v1075, %v1093
    %v1096 = vadd.f32 %v1076, %v1094
    %1097 = vrot.lane.b32.xlu0 %v407, 127
    %v1098 = vpop.permute.xlu0 %1097
    %1099 = vrot.lane.b32.xlu0 %v416, 127
    %v1100 = vpop.permute.xlu0 %1099
    %v1101 = vsel %vm618, %v1098, %v1100
    %v1102 = vsel %vm618, %v1100, %v1098
    %v1103 = vmul.f32 %v1101, %v621
    %v1104 = vmul.f32 %v1102, %v622
    %v1105 = vlaneseq
    %v1106 = vshrl.u32 %v1105, 7
    %v1107 = vsub.s32 0, %v1106
    %v1108 = vrot.slane %v1103, %v1107
    %v1109 = vlaneseq
    %v1110 = vshrl.u32 %v1109, 7
    %v1111 = vsub.s32 0, %v1110
    %v1112 = vrot.slane %v1104, %v1111
    %v1113 = vmul.f32 %v653, %v1108
    %v1114 = vmul.f32 %v653, %v1112
    %v1115 = vadd.f32 %v1095, %v1113
    %v1116 = vadd.f32 %v1096, %v1114
    %1117 = vrot.lane.b32.xlu0 %v379, 126
    %v1118 = vpop.permute.xlu0 %1117
    %1119 = vrot.lane.b32.xlu0 %v380, 126
    %v1120 = vpop.permute.xlu0 %1119
    %v1121 = vsel %vm671, %v1118, %v1120
    %v1122 = vsel %vm671, %v1120, %v1118
    %v1123 = vmul.f32 %v1121, %v674
    %v1124 = vmul.f32 %v1122, %v675
    %v1125 = vlaneseq
    %v1126 = vshrl.u32 %v1125, 7
    %v1127 = vsub.s32 0, %v1126
    %v1128 = vrot.slane %v1123, %v1127
    %v1129 = vlaneseq
    %v1130 = vshrl.u32 %v1129, 7
    %v1131 = vsub.s32 0, %v1130
    %v1132 = vrot.slane %v1124, %v1131
    %v1133 = vmul.f32 %v682, %v1128
    %v1134 = vmul.f32 %v682, %v1132
    %v1135 = vadd.f32 %v1115, %v1133
    %v1136 = vadd.f32 %v1116, %v1134
    %1137 = vrot.lane.b32.xlu0 %v407, 126
    %v1138 = vpop.permute.xlu0 %1137
    %1139 = vrot.lane.b32.xlu0 %v416, 126
    %v1140 = vpop.permute.xlu0 %1139
    %v1141 = vsel %vm671, %v1138, %v1140
    %v1142 = vsel %vm671, %v1140, %v1138
    %v1143 = vmul.f32 %v1141, %v674
    %v1144 = vmul.f32 %v1142, %v675
    %v1145 = vlaneseq
    %v1146 = vshrl.u32 %v1145, 7
    %v1147 = vsub.s32 0, %v1146
    %v1148 = vrot.slane %v1143, %v1147
    %v1149 = vlaneseq
    %v1150 = vshrl.u32 %v1149, 7
    %v1151 = vsub.s32 0, %v1150
    %v1152 = vrot.slane %v1144, %v1151
    %v1153 = vmul.f32 %v706, %v1148
    %v1154 = vmul.f32 %v706, %v1152
    %v1155 = vadd.f32 %v1135, %v1153
    %v1156 = vadd.f32 %v1136, %v1154
    %1157 = vrot.lane.b32.xlu0 %v379, 125
    %v1158 = vpop.permute.xlu0 %1157
    %1159 = vrot.lane.b32.xlu0 %v380, 125
    %v1160 = vpop.permute.xlu0 %1159
    %v1161 = vsel %vm724, %v1158, %v1160
    %v1162 = vsel %vm724, %v1160, %v1158
    %v1163 = vmul.f32 %v1161, %v727
    %v1164 = vmul.f32 %v1162, %v728
    %v1165 = vlaneseq
    %v1166 = vshrl.u32 %v1165, 7
    %v1167 = vsub.s32 0, %v1166
    %v1168 = vrot.slane %v1163, %v1167
    %v1169 = vlaneseq
    %v1170 = vshrl.u32 %v1169, 7
    %v1171 = vsub.s32 0, %v1170
    %v1172 = vrot.slane %v1164, %v1171
    %v1173 = vmul.f32 %v735, %v1168
    %v1174 = vmul.f32 %v735, %v1172
    %v1175 = vadd.f32 %v1155, %v1173
    %v1176 = vadd.f32 %v1156, %v1174
    %1177 = vrot.lane.b32.xlu0 %v407, 125
    %v1178 = vpop.permute.xlu0 %1177
    %1179 = vrot.lane.b32.xlu0 %v416, 125
    %v1180 = vpop.permute.xlu0 %1179
    %v1181 = vsel %vm724, %v1178, %v1180
    %v1182 = vsel %vm724, %v1180, %v1178
    %v1183 = vmul.f32 %v1181, %v727
    %v1184 = vmul.f32 %v1182, %v728
    %v1185 = vlaneseq
    %v1186 = vshrl.u32 %v1185, 7
    %v1187 = vsub.s32 0, %v1186
    %v1188 = vrot.slane %v1183, %v1187
    %v1189 = vlaneseq
    %v1190 = vshrl.u32 %v1189, 7
    %v1191 = vsub.s32 0, %v1190
    %v1192 = vrot.slane %v1184, %v1191
    %v1193 = vmul.f32 %v759, %v1188
    %v1194 = vmul.f32 %v759, %v1192
    %v1195 = vadd.f32 %v1175, %v1193
    %v1196 = vadd.f32 %v1176, %v1194
    %1197 = vrot.lane.b32.xlu0 %v1195, 48
    %v1198 = vpop.permute.xlu0 %1197
    %1199 = vrot.lane.b32.xlu0 %v1196, 48
    %v1200 = vpop.permute.xlu0 %1199
    %v1201 = vsel %vm777, %v1198, %v1200
    %v1202 = vsel %vm777, %v1200, %v1198
    %v1203 = vmul.f32 %v1202, %v68
    %v1204 = vmul.f32 %v1201, %v69
    %v1205 = vadd.f32 %v1203, 0.0
    %v1206 = vadd.f32 %v1204, 0.0
    %v1209 = vrot.slane %v1195, 1
    %v1210 = vrot.slane %v1196, 1
    %1213 = vrot.lane.b32.xlu0 %v1209, 32
    %v1214 = vpop.permute.xlu0 %1213
    %1215 = vrot.lane.b32.xlu0 %v1210, 32
    %v1216 = vpop.permute.xlu0 %1215
    %v1217 = vsel %vm794, %v1214, %v1216
    %v1218 = vsel %vm794, %v1216, %v1214
    %v1219 = vmul.f32 %v1218, %v799
    %v1220 = vmul.f32 %v1217, %v800
    %v1221 = vadd.f32 %v1205, %v1219
    %v1222 = vadd.f32 %v1206, %v1220
    %v1223 = vrot.slane %v1195, 2
    %v1224 = vrot.slane %v1196, 2
    %1227 = vrot.lane.b32.xlu0 %v1223, 16
    %v1228 = vpop.permute.xlu0 %1227
    %1229 = vrot.lane.b32.xlu0 %v1224, 16
    %v1230 = vpop.permute.xlu0 %1229
    %v1231 = vsel %vm815, %v1228, %v1230
    %v1232 = vsel %vm815, %v1230, %v1228
    %v1233 = vmul.f32 %v1232, %v818
    %v1234 = vmul.f32 %v1231, %v819
    %v1235 = vadd.f32 %v1221, %v1233
    %v1236 = vadd.f32 %v1222, %v1234
    %v1237 = vmul.f32 %v1195, %v68
    %v1238 = vmul.f32 %v1196, %v69
    %v1241 = vrot.slane %v1237, 3
    %v1242 = vrot.slane %v1238, 3
    %v1245 = vadd.f32 %v1235, %v1241
    %v1246 = vadd.f32 %v1236, %v1242
    %v1247 = vrot.slane %v1195, 4
    %v1248 = vrot.slane %v1196, 4
    %1251 = vrot.lane.b32.xlu0 %v1247, 112
    %v1252 = vpop.permute.xlu0 %1251
    %1253 = vrot.lane.b32.xlu0 %v1248, 112
    %v1254 = vpop.permute.xlu0 %1253
    %v1255 = vsel %vm844, %v1252, %v1254
    %v1256 = vsel %vm844, %v1254, %v1252
    %v1257 = vmul.f32 %v1255, %v847
    %v1258 = vmul.f32 %v1256, %v848
    %v1259 = vadd.f32 %v1245, %v1257
    %v1260 = vadd.f32 %v1246, %v1258
    %v1261 = vrot.slane %v1195, 5
    %v1262 = vrot.slane %v1196, 5
    %1265 = vrot.lane.b32.xlu0 %v1261, 96
    %v1266 = vpop.permute.xlu0 %1265
    %1267 = vrot.lane.b32.xlu0 %v1262, 96
    %v1268 = vpop.permute.xlu0 %1267
    %v1269 = vsel %vm863, %v1266, %v1268
    %v1270 = vsel %vm863, %v1268, %v1266
    %v1271 = vmul.f32 %v1269, %v866
    %v1272 = vmul.f32 %v1270, %v867
    %v1273 = vadd.f32 %v1259, %v1271
    %v1274 = vadd.f32 %v1260, %v1272
    %v1275 = vrot.slane %v1195, 6
    %v1276 = vrot.slane %v1196, 6
    %1279 = vrot.lane.b32.xlu0 %v1275, 80
    %v1280 = vpop.permute.xlu0 %1279
    %1281 = vrot.lane.b32.xlu0 %v1276, 80
    %v1282 = vpop.permute.xlu0 %1281
    %v1283 = vsel %vm882, %v1280, %v1282
    %v1284 = vsel %vm882, %v1282, %v1280
    %v1285 = vmul.f32 %v1283, %v885
    %v1286 = vmul.f32 %v1284, %v886
    %v1287 = vadd.f32 %v1273, %v1285
    %v1288 = vadd.f32 %v1274, %v1286
    %v1289 = vxor.u32 %v1287, 2147483648
    %v1290 = vxor.u32 %v1288, 2147483648
    %v1291 = vmul.f32 %v1289, 1.442695
    %v1292 = vpow.pop %v1291
    %v1293 = vmul.f32 %v1290, 1.442695
    %v1294 = vpow.pop %v1293
    %v1295 = vadd.f32 %v1292, 1.0
    %v1296 = vadd.f32 %v1294, 1.0
    %v1297 = vrcp.pop %v1295
    %v1298 = vmul.f32 1.0, %v1297
    %v1299 = vrcp.pop %v1296
    %v1300 = vmul.f32 1.0, %v1299
    %v1301 = vlaneseq
    %v1302 = vshrl.u32 %v1301, 7
    %v1303 = vsub.s32 0, %v1302
    %v1304 = vrot.slane %v1298, %v1303
    %v1305 = vlaneseq
    %v1306 = vshrl.u32 %v1305, 7
    %v1307 = vsub.s32 0, %v1306
    %v1308 = vrot.slane %v1300, %v1307
    %v1309 = vmul.f32 %v332, %v1304
    %v1310 = vmul.f32 %v333, %v1308
    %v1311 = vmul.f32 %v334, %v1304
    %v1312 = vmul.f32 %v335, %v1308
    %v1313 = vmul.f32 %v336, %v1304
    %v1314 = vmul.f32 %v337, %v1308
    %v1315 = vmul.f32 %v338, %v1304
    %v1316 = vmul.f32 %v339, %v1308
    %s1317 = scalar_lea.vmem [#allocation7], 64
    %1318 = vst [vmem:[%s1317] sm:$0xff] %v1309
    %1319 = vst [vmem:[%s1317 + $0x8] sm:$0xff] %v1310
    %1320 = vst [vmem:[%s1317 + $0x10] sm:$0xff] %v1311
    %1321 = vst [vmem:[%s1317 + $0x18] sm:$0xff] %v1312
    %1322 = vst [vmem:[%s1317 + $0x20] sm:$0xff] %v1313
    %1323 = vst [vmem:[%s1317 + $0x28] sm:$0xff] %v1314
    %1324 = vst [vmem:[%s1317 + $0x30] sm:$0xff] %v1315
    %1325 = vst [vmem:[%s1317 + $0x38] sm:$0xff] %v1316
    // Predicated region
    $region26: #{tpu_custom_call.1} parent=1 // pred_check
      _
    $region27: #{tpu_custom_call.1} parent=1 // pred_check_branch
      %1327 = sbr.rel (0) target = $region29
    $region28: #{tpu_custom_call.1} parent=1 // pred_region
      %s1329 = ssub.s32 2048, 2048
      %1330 = vsyncadd [#allocation4], %s1329
      %s1331 = sshll.u32 [#allocation7], 4
      %s1332 = int_to_ptr.vmem [resolvable:$true] %s1331
      %1337 = dma.vmem_to_hbm [thread:$0]  %s1332, 2048, %s4, [#allocation4], 256, 256, 16
    $region29: #{tpu_custom_call.1} parent=1 // pred_fallthru
      _
    // Predicated region
    $region30: #{tpu_custom_call.1} parent=1 // pred_check
      _
    $region31: #{tpu_custom_call.1} parent=1 // pred_check_branch
      %1339 = sbr.rel (0) target = $region33
    $region32: #{tpu_custom_call.1} parent=1 // pred_region
      %1340 = dma.done [#allocation4], 2048
    $region33: #{tpu_custom_call.1} parent=1 // pred_fallthru
      _
    %1341 = vsyncpa [#allocation3], 1
    %1342 = vsyncpa [#allocation6], 1
    %1343 = vsyncpa [#allocation4], 1

</llo_original>
